<compile_context>
chip_gen: v6e
topology: v6e:2x2x1
jax: 0.10.0
libtpu: 0.0.40
codegen_flags: <defaults>
</compile_context>

<pallas_src>
import jax
import jax.numpy as jnp
from jax import lax
from jax.experimental import pallas as pl
from jax.experimental.pallas import tpu as pltpu

# 3x3 tap offsets; tap index k = (di+1)*3 + (dj+1) matches the OIHW->(kh,kw,O,I) reshape
_OFFSETS = tuple((di, dj) for di in (-1, 0, 1) for dj in (-1, 0, 1))


def modified_slowfast_forward(x_nchw, w1, b1, w2, b2):
    """features (2x [3x3 conv s1 p1 + ReLU]) -> AdaptiveAvgPool2d((1,1)) -> (N,C,1,1)."""
    N, Cin, H, W = x_nchw.shape
    Cmid = w1.shape[0]
    Cout = w2.shape[0]
    HW = H * W
    PAD = W + 1                  # halo: one zero row + one extra element each side
    L = HW + 2 * PAD             # padded flat length per channel

    # ---- layout prep (cheap XLA glue; +~13% bytes, not the old 9x im2col) --------
    # channels-first flat layout with halo: [0]*PAD ++ row-major(H*W) ++ [0]*PAD
    xp = jnp.pad(x_nchw, ((0, 0), (0, 0), (1, 1), (0, 0)))            # zero rows
    xp = xp.reshape(N, Cin, (H + 2) * W)
    xp = jnp.pad(xp, ((0, 0), (0, 0), (1, 1))).astype(jnp.bfloat16)   # (N, Cin, L)

    # PyTorch OIHW -> (9, O, I), bf16 MXU operands; biases stay f32
    w1k = jnp.transpose(w1, (2, 3, 0, 1)).reshape(9, Cmid, Cin).astype(jnp.bfloat16)
    w2k = jnp.transpose(w2, (2, 3, 0, 1)).reshape(9, Cout, Cmid).astype(jnp.bfloat16)
    b1c = b1.reshape(Cmid, 1).astype(jnp.float32)
    b2c = b2.reshape(Cout, 1).astype(jnp.float32)

    # per-tap validity masks (zero-padding semantics); shared by both convs
    p = jnp.arange(HW, dtype=jnp.int32)
    r, c = p // W, p % W
    masks = jnp.stack(
        [((r + di >= 0) & (r + di < H) & (c + dj >= 0) & (c + dj < W))
         for (di, dj) in _OFFSETS], axis=0)
    masks = masks.astype(jnp.float32).reshape(9, 1, HW)               # (9, 1, HW)

    def fused_kernel(x_ref, w1_ref, b1_ref, w2_ref, b2_ref, m_ref, o_ref):
        a0 = x_ref[0].astype(jnp.float32)                  # (Cin, L)

        def conv3x3_relu(a_pad, w_ref, b_ref):
            cout = w_ref.shape[1]
            acc = jnp.zeros((cout, HW), jnp.float32)
            for k, (di, dj) in enumerate(_OFFSETS):
                start = PAD + di * W + dj                  # static, in [0, 2*PAD]
                win = a_pad[:, start:start + HW]           # (cin, HW) f32, lane-dense
                if di != 0 or dj != 0:
                    win = win * m_ref[k]                   # zero-padding mask
                acc = acc + jnp.dot(w_ref[k], win.astype(jnp.bfloat16),
                                    preferred_element_type=jnp.float32)
            return jnp.maximum(acc + b_ref[...], 0.0)      # bias + ReLU in f32

        h1 = conv3x3_relu(a0, w1_ref, b1_ref)              # (Cmid, HW) f32, VMEM only
        zpad = jnp.zeros((h1.shape[0], PAD), jnp.float32)
        h1p = jnp.concatenate([zpad, h1, zpad], axis=1)    # re-halo for conv2
        h2 = conv3x3_relu(h1p, w2_ref, b2_ref)             # (Cout, HW) f32

        # fused AdaptiveAvgPool2d((1,1)) epilogue
        o_ref[0] = jnp.mean(h2, axis=1, keepdims=True)     # (Cout, 1)

    out = pl.pallas_call(
        fused_kernel,
        out_shape=jax.ShapeDtypeStruct((N, Cout, 1), jnp.float32),
        grid=(N,),
        in_specs=[
            pl.BlockSpec((1, Cin, L), lambda n: (n, 0, 0)),
            pl.BlockSpec((9, Cmid, Cin), lambda n: (0, 0, 0)),
            pl.BlockSpec((Cmid, 1), lambda n: (0, 0)),
            pl.BlockSpec((9, Cout, Cmid), lambda n: (0, 0, 0)),
            pl.BlockSpec((Cout, 1), lambda n: (0, 0)),
            pl.BlockSpec((9, 1, HW), lambda n: (0, 0, 0)),
        ],
        out_specs=pl.BlockSpec((1, Cout, 1), lambda n: (n, 0, 0)),
        compiler_params=pltpu.CompilerParams(
            dimension_semantics=("parallel",)),
    )(xp, w1k, b1c, w2k, b2c, masks)

    return out.reshape(N, Cout, 1, 1)


class ModifiedSlowFastPallas:
    """Pallas version of ModifiedSlowFast: features(x) -> AdaptiveAvgPool2d((1,1))."""

    def __init__(self, key, c_in=4, c_mid=8, c_out=16):
        k1, k2, k3, k4 = jax.random.split(key, 4)
        # Deterministic synthetic parameters (PyTorch OIHW conv layout).
        self.w1 = 0.1 * jax.random.normal(k1, (c_mid, c_in, 3, 3), jnp.float32)
        self.b1 = 0.1 * jax.random.normal(k2, (c_mid,), jnp.float32)
        self.w2 = 0.1 * jax.random.normal(k3, (c_out, c_mid, 3, 3), jnp.float32)
        self.b2 = 0.1 * jax.random.normal(k4, (c_out,), jnp.float32)

    def __call__(self, x_nchw):
        return modified_slowfast_forward(x_nchw, self.w1, self.b1, self.w2, self.b2)


# ---------------------------------------------------------------------------
# Pure-JAX reference (matches the kernel's bf16 operand rounding, f32 accumulation)
# ---------------------------------------------------------------------------

def _ref_forward(model, x):
    def rb(a):  # round MXU operands to bf16, accumulate in f32 (as the kernel does)
        return a.astype(jnp.bfloat16).astype(jnp.float32)

    def conv(x, w, b):
        y = lax.conv_general_dilated(
            rb(x), rb(w), window_strides=(1, 1), padding=((1, 1), (1, 1)),
            dimension_numbers=("NCHW", "OIHW", "NCHW"),
            precision=lax.Precision.HIGHEST)
        return jnp.maximum(y + b.reshape(1, -1, 1, 1), 0.0)

    h1 = conv(x, model.w1, model.b1)
    h2 = conv(h1, model.w2, model.b2)
    return jnp.mean(h2, axis=(2, 3), keepdims=True)


if __name__ == "__main__":
    key = jax.random.PRNGKey(0)
    k_in, k_params = jax.random.split(key)

    # small shapes consistent with the module: NCHW input
    x = jax.random.normal(k_in, (2, 4, 16, 16), jnp.float32)

    model = ModifiedSlowFastPallas(k_params)
    out = jax.block_until_ready(model(x))
    assert out.shape == (2, 16, 1, 1), out.shape

    ref = jax.block_until_ready(_ref_forward(model, x))
    max_err = float(jnp.max(jnp.abs(out - ref)))
    assert jnp.allclose(out, ref, atol=5e-3, rtol=5e-3), f"mismatch vs ref: {max_err}"

    print("KERNEL_OK")
</pallas_src>

<mosaic_0001>
module attributes {stable_mosaic.version = 11 : i64} {
  func.func @fused_kernel(%arg0: i32, %arg1: memref<1x4x290xbf16, #tpu.memory_space<vmem>>, %arg2: memref<9x8x4xbf16, #tpu.memory_space<vmem>>, %arg3: memref<8x1xf32, #tpu.memory_space<vmem>>, %arg4: memref<9x16x8xbf16, #tpu.memory_space<vmem>>, %arg5: memref<16x1xf32, #tpu.memory_space<vmem>>, %arg6: memref<9x1x256xf32, #tpu.memory_space<vmem>>, %arg7: memref<1x16x1xf32, #tpu.memory_space<vmem>>) attributes {dimension_semantics = [#tpu.dimension_semantics<parallel>], iteration_bounds = array<i64: 2>, scalar_prefetch = 0 : i64, scratch_operands = 0 : i64, tpu.core_type = #tpu.core_type<tc>, window_params = [{transform_indices = @transform_0, window_bounds = array<i64: 1, 4, 290>}, {pipeline_mode = #tpu.pipeline_mode<synchronous>, transform_indices = @transform_1, window_bounds = array<i64: 9, 8, 4>}, {pipeline_mode = #tpu.pipeline_mode<synchronous>, transform_indices = @transform_2, window_bounds = array<i64: 8, 1>}, {pipeline_mode = #tpu.pipeline_mode<synchronous>, transform_indices = @transform_3, window_bounds = array<i64: 9, 16, 8>}, {pipeline_mode = #tpu.pipeline_mode<synchronous>, transform_indices = @transform_4, window_bounds = array<i64: 16, 1>}, {pipeline_mode = #tpu.pipeline_mode<synchronous>, transform_indices = @transform_5, window_bounds = array<i64: 9, 1, 256>}, {transform_indices = @transform_6, window_bounds = array<i64: 1, 16, 1>}]} {
    %c0 = arith.constant 0 : index
    %c0_0 = arith.constant 0 : index
    %c0_1 = arith.constant 0 : index
    %0 = vector.load %arg1[%c0, %c0_0, %c0_1] : memref<1x4x290xbf16, #tpu.memory_space<vmem>>, vector<1x4x290xbf16>
    %1 = vector.shape_cast %0 : vector<1x4x290xbf16> to vector<4x290xbf16>
    %2 = arith.extf %1 : vector<4x290xbf16> to vector<4x290xf32>
    %cst = arith.constant 0.000000e+00 : f32
    %3 = vector.broadcast %cst : f32 to vector<8x256xf32>
    %4 = vector.extract_strided_slice %2 {offsets = [0, 0], sizes = [4, 256], strides = [1, 1]} : vector<4x290xf32> to vector<4x256xf32>
    %c0_2 = arith.constant 0 : index
    %c0_3 = arith.constant 0 : index
    %c0_4 = arith.constant 0 : index
    %5 = vector.load %arg6[%c0_2, %c0_3, %c0_4] : memref<9x1x256xf32, #tpu.memory_space<vmem>>, vector<1x1x256xf32>
    %6 = vector.shape_cast %5 : vector<1x1x256xf32> to vector<1x256xf32>
    %7 = vector.broadcast %6 : vector<1x256xf32> to vector<4x256xf32>
    %8 = arith.mulf %4, %7 : vector<4x256xf32>
    %c0_5 = arith.constant 0 : index
    %c0_6 = arith.constant 0 : index
    %c0_7 = arith.constant 0 : index
    %9 = vector.load %arg2[%c0_5, %c0_6, %c0_7] : memref<9x8x4xbf16, #tpu.memory_space<vmem>>, vector<1x8x4xbf16>
    %10 = vector.shape_cast %9 : vector<1x8x4xbf16> to vector<8x4xbf16>
    %11 = arith.truncf %8 : vector<4x256xf32> to vector<4x256xbf16>
    %cst_8 = arith.constant dense<0.000000e+00> : vector<8x256xf32>
    %12 = tpu.matmul %10, %11, %cst_8 {dimension_numbers = #tpu.dot_dimension_numbers<[1], [0], [0], [1], [0, 0, 1, 1], [], []>} : vector<8x4xbf16>, vector<4x256xbf16>, vector<8x256xf32> -> vector<8x256xf32>
    %13 = arith.addf %3, %12 : vector<8x256xf32>
    %14 = vector.extract_strided_slice %2 {offsets = [0, 1], sizes = [4, 256], strides = [1, 1]} : vector<4x290xf32> to vector<4x256xf32>
    %c1 = arith.constant 1 : index
    %c0_9 = arith.constant 0 : index
    %c0_10 = arith.constant 0 : index
    %15 = vector.load %arg6[%c1, %c0_9, %c0_10] : memref<9x1x256xf32, #tpu.memory_space<vmem>>, vector<1x1x256xf32>
    %16 = vector.shape_cast %15 : vector<1x1x256xf32> to vector<1x256xf32>
    %17 = vector.broadcast %16 : vector<1x256xf32> to vector<4x256xf32>
    %18 = arith.mulf %14, %17 : vector<4x256xf32>
    %c1_11 = arith.constant 1 : index
    %c0_12 = arith.constant 0 : index
    %c0_13 = arith.constant 0 : index
    %19 = vector.load %arg2[%c1_11, %c0_12, %c0_13] : memref<9x8x4xbf16, #tpu.memory_space<vmem>>, vector<1x8x4xbf16>
    %20 = vector.shape_cast %19 : vector<1x8x4xbf16> to vector<8x4xbf16>
    %21 = arith.truncf %18 : vector<4x256xf32> to vector<4x256xbf16>
    %cst_14 = arith.constant dense<0.000000e+00> : vector<8x256xf32>
    %22 = tpu.matmul %20, %21, %cst_14 {dimension_numbers = #tpu.dot_dimension_numbers<[1], [0], [0], [1], [0, 0, 1, 1], [], []>} : vector<8x4xbf16>, vector<4x256xbf16>, vector<8x256xf32> -> vector<8x256xf32>
    %23 = arith.addf %13, %22 : vector<8x256xf32>
    %24 = vector.extract_strided_slice %2 {offsets = [0, 2], sizes = [4, 256], strides = [1, 1]} : vector<4x290xf32> to vector<4x256xf32>
    %c2 = arith.constant 2 : index
    %c0_15 = arith.constant 0 : index
    %c0_16 = arith.constant 0 : index
    %25 = vector.load %arg6[%c2, %c0_15, %c0_16] : memref<9x1x256xf32, #tpu.memory_space<vmem>>, vector<1x1x256xf32>
    %26 = vector.shape_cast %25 : vector<1x1x256xf32> to vector<1x256xf32>
    %27 = vector.broadcast %26 : vector<1x256xf32> to vector<4x256xf32>
    %28 = arith.mulf %24, %27 : vector<4x256xf32>
    %c2_17 = arith.constant 2 : index
    %c0_18 = arith.constant 0 : index
    %c0_19 = arith.constant 0 : index
    %29 = vector.load %arg2[%c2_17, %c0_18, %c0_19] : memref<9x8x4xbf16, #tpu.memory_space<vmem>>, vector<1x8x4xbf16>
    %30 = vector.shape_cast %29 : vector<1x8x4xbf16> to vector<8x4xbf16>
    %31 = arith.truncf %28 : vector<4x256xf32> to vector<4x256xbf16>
    %cst_20 = arith.constant dense<0.000000e+00> : vector<8x256xf32>
    %32 = tpu.matmul %30, %31, %cst_20 {dimension_numbers = #tpu.dot_dimension_numbers<[1], [0], [0], [1], [0, 0, 1, 1], [], []>} : vector<8x4xbf16>, vector<4x256xbf16>, vector<8x256xf32> -> vector<8x256xf32>
    %33 = arith.addf %23, %32 : vector<8x256xf32>
    %34 = vector.extract_strided_slice %2 {offsets = [0, 16], sizes = [4, 256], strides = [1, 1]} : vector<4x290xf32> to vector<4x256xf32>
    %c3 = arith.constant 3 : index
    %c0_21 = arith.constant 0 : index
    %c0_22 = arith.constant 0 : index
    %35 = vector.load %arg6[%c3, %c0_21, %c0_22] : memref<9x1x256xf32, #tpu.memory_space<vmem>>, vector<1x1x256xf32>
    %36 = vector.shape_cast %35 : vector<1x1x256xf32> to vector<1x256xf32>
    %37 = vector.broadcast %36 : vector<1x256xf32> to vector<4x256xf32>
    %38 = arith.mulf %34, %37 : vector<4x256xf32>
    %c3_23 = arith.constant 3 : index
    %c0_24 = arith.constant 0 : index
    %c0_25 = arith.constant 0 : index
    %39 = vector.load %arg2[%c3_23, %c0_24, %c0_25] : memref<9x8x4xbf16, #tpu.memory_space<vmem>>, vector<1x8x4xbf16>
    %40 = vector.shape_cast %39 : vector<1x8x4xbf16> to vector<8x4xbf16>
    %41 = arith.truncf %38 : vector<4x256xf32> to vector<4x256xbf16>
    %cst_26 = arith.constant dense<0.000000e+00> : vector<8x256xf32>
    %42 = tpu.matmul %40, %41, %cst_26 {dimension_numbers = #tpu.dot_dimension_numbers<[1], [0], [0], [1], [0, 0, 1, 1], [], []>} : vector<8x4xbf16>, vector<4x256xbf16>, vector<8x256xf32> -> vector<8x256xf32>
    %43 = arith.addf %33, %42 : vector<8x256xf32>
    %44 = vector.extract_strided_slice %2 {offsets = [0, 17], sizes = [4, 256], strides = [1, 1]} : vector<4x290xf32> to vector<4x256xf32>
    %c4 = arith.constant 4 : index
    %c0_27 = arith.constant 0 : index
    %c0_28 = arith.constant 0 : index
    %45 = vector.load %arg2[%c4, %c0_27, %c0_28] : memref<9x8x4xbf16, #tpu.memory_space<vmem>>, vector<1x8x4xbf16>
    %46 = vector.shape_cast %45 : vector<1x8x4xbf16> to vector<8x4xbf16>
    %47 = arith.truncf %44 : vector<4x256xf32> to vector<4x256xbf16>
    %cst_29 = arith.constant dense<0.000000e+00> : vector<8x256xf32>
    %48 = tpu.matmul %46, %47, %cst_29 {dimension_numbers = #tpu.dot_dimension_numbers<[1], [0], [0], [1], [0, 0, 1, 1], [], []>} : vector<8x4xbf16>, vector<4x256xbf16>, vector<8x256xf32> -> vector<8x256xf32>
    %49 = arith.addf %43, %48 : vector<8x256xf32>
    %50 = vector.extract_strided_slice %2 {offsets = [0, 18], sizes = [4, 256], strides = [1, 1]} : vector<4x290xf32> to vector<4x256xf32>
    %c5 = arith.constant 5 : index
    %c0_30 = arith.constant 0 : index
    %c0_31 = arith.constant 0 : index
    %51 = vector.load %arg6[%c5, %c0_30, %c0_31] : memref<9x1x256xf32, #tpu.memory_space<vmem>>, vector<1x1x256xf32>
    %52 = vector.shape_cast %51 : vector<1x1x256xf32> to vector<1x256xf32>
    %53 = vector.broadcast %52 : vector<1x256xf32> to vector<4x256xf32>
    %54 = arith.mulf %50, %53 : vector<4x256xf32>
    %c5_32 = arith.constant 5 : index
    %c0_33 = arith.constant 0 : index
    %c0_34 = arith.constant 0 : index
    %55 = vector.load %arg2[%c5_32, %c0_33, %c0_34] : memref<9x8x4xbf16, #tpu.memory_space<vmem>>, vector<1x8x4xbf16>
    %56 = vector.shape_cast %55 : vector<1x8x4xbf16> to vector<8x4xbf16>
    %57 = arith.truncf %54 : vector<4x256xf32> to vector<4x256xbf16>
    %cst_35 = arith.constant dense<0.000000e+00> : vector<8x256xf32>
    %58 = tpu.matmul %56, %57, %cst_35 {dimension_numbers = #tpu.dot_dimension_numbers<[1], [0], [0], [1], [0, 0, 1, 1], [], []>} : vector<8x4xbf16>, vector<4x256xbf16>, vector<8x256xf32> -> vector<8x256xf32>
    %59 = arith.addf %49, %58 : vector<8x256xf32>
    %60 = vector.extract_strided_slice %2 {offsets = [0, 32], sizes = [4, 256], strides = [1, 1]} : vector<4x290xf32> to vector<4x256xf32>
    %c6 = arith.constant 6 : index
    %c0_36 = arith.constant 0 : index
    %c0_37 = arith.constant 0 : index
    %61 = vector.load %arg6[%c6, %c0_36, %c0_37] : memref<9x1x256xf32, #tpu.memory_space<vmem>>, vector<1x1x256xf32>
    %62 = vector.shape_cast %61 : vector<1x1x256xf32> to vector<1x256xf32>
    %63 = vector.broadcast %62 : vector<1x256xf32> to vector<4x256xf32>
    %64 = arith.mulf %60, %63 : vector<4x256xf32>
    %c6_38 = arith.constant 6 : index
    %c0_39 = arith.constant 0 : index
    %c0_40 = arith.constant 0 : index
    %65 = vector.load %arg2[%c6_38, %c0_39, %c0_40] : memref<9x8x4xbf16, #tpu.memory_space<vmem>>, vector<1x8x4xbf16>
    %66 = vector.shape_cast %65 : vector<1x8x4xbf16> to vector<8x4xbf16>
    %67 = arith.truncf %64 : vector<4x256xf32> to vector<4x256xbf16>
    %cst_41 = arith.constant dense<0.000000e+00> : vector<8x256xf32>
    %68 = tpu.matmul %66, %67, %cst_41 {dimension_numbers = #tpu.dot_dimension_numbers<[1], [0], [0], [1], [0, 0, 1, 1], [], []>} : vector<8x4xbf16>, vector<4x256xbf16>, vector<8x256xf32> -> vector<8x256xf32>
    %69 = arith.addf %59, %68 : vector<8x256xf32>
    %70 = vector.extract_strided_slice %2 {offsets = [0, 33], sizes = [4, 256], strides = [1, 1]} : vector<4x290xf32> to vector<4x256xf32>
    %c7 = arith.constant 7 : index
    %c0_42 = arith.constant 0 : index
    %c0_43 = arith.constant 0 : index
    %71 = vector.load %arg6[%c7, %c0_42, %c0_43] : memref<9x1x256xf32, #tpu.memory_space<vmem>>, vector<1x1x256xf32>
    %72 = vector.shape_cast %71 : vector<1x1x256xf32> to vector<1x256xf32>
    %73 = vector.broadcast %72 : vector<1x256xf32> to vector<4x256xf32>
    %74 = arith.mulf %70, %73 : vector<4x256xf32>
    %c7_44 = arith.constant 7 : index
    %c0_45 = arith.constant 0 : index
    %c0_46 = arith.constant 0 : index
    %75 = vector.load %arg2[%c7_44, %c0_45, %c0_46] : memref<9x8x4xbf16, #tpu.memory_space<vmem>>, vector<1x8x4xbf16>
    %76 = vector.shape_cast %75 : vector<1x8x4xbf16> to vector<8x4xbf16>
    %77 = arith.truncf %74 : vector<4x256xf32> to vector<4x256xbf16>
    %cst_47 = arith.constant dense<0.000000e+00> : vector<8x256xf32>
    %78 = tpu.matmul %76, %77, %cst_47 {dimension_numbers = #tpu.dot_dimension_numbers<[1], [0], [0], [1], [0, 0, 1, 1], [], []>} : vector<8x4xbf16>, vector<4x256xbf16>, vector<8x256xf32> -> vector<8x256xf32>
    %79 = arith.addf %69, %78 : vector<8x256xf32>
    %80 = vector.extract_strided_slice %2 {offsets = [0, 34], sizes = [4, 256], strides = [1, 1]} : vector<4x290xf32> to vector<4x256xf32>
    %c8 = arith.constant 8 : index
    %c0_48 = arith.constant 0 : index
    %c0_49 = arith.constant 0 : index
    %81 = vector.load %arg6[%c8, %c0_48, %c0_49] : memref<9x1x256xf32, #tpu.memory_space<vmem>>, vector<1x1x256xf32>
    %82 = vector.shape_cast %81 : vector<1x1x256xf32> to vector<1x256xf32>
    %83 = vector.broadcast %82 : vector<1x256xf32> to vector<4x256xf32>
    %84 = arith.mulf %80, %83 : vector<4x256xf32>
    %c8_50 = arith.constant 8 : index
    %c0_51 = arith.constant 0 : index
    %c0_52 = arith.constant 0 : index
    %85 = vector.load %arg2[%c8_50, %c0_51, %c0_52] : memref<9x8x4xbf16, #tpu.memory_space<vmem>>, vector<1x8x4xbf16>
    %86 = vector.shape_cast %85 : vector<1x8x4xbf16> to vector<8x4xbf16>
    %87 = arith.truncf %84 : vector<4x256xf32> to vector<4x256xbf16>
    %cst_53 = arith.constant dense<0.000000e+00> : vector<8x256xf32>
    %88 = tpu.matmul %86, %87, %cst_53 {dimension_numbers = #tpu.dot_dimension_numbers<[1], [0], [0], [1], [0, 0, 1, 1], [], []>} : vector<8x4xbf16>, vector<4x256xbf16>, vector<8x256xf32> -> vector<8x256xf32>
    %89 = arith.addf %79, %88 : vector<8x256xf32>
    %c0_54 = arith.constant 0 : index
    %c0_55 = arith.constant 0 : index
    %90 = vector.load %arg3[%c0_54, %c0_55] : memref<8x1xf32, #tpu.memory_space<vmem>>, vector<8x1xf32>
    %91 = vector.broadcast %90 : vector<8x1xf32> to vector<8x256xf32>
    %92 = arith.addf %89, %91 : vector<8x256xf32>
    %cst_56 = arith.constant 0.000000e+00 : f32
    %93 = vector.broadcast %cst_56 : f32 to vector<8x256xf32>
    %94 = arith.maximumf %92, %93 : vector<8x256xf32>
    %cst_57 = arith.constant 0.000000e+00 : f32
    %95 = vector.broadcast %cst_57 : f32 to vector<8x17xf32>
    %96 = tpu.concatenate %95, %94, %95 in 1 : vector<8x17xf32>, vector<8x256xf32>, vector<8x17xf32> -> vector<8x290xf32>
    %cst_58 = arith.constant 0.000000e+00 : f32
    %97 = vector.broadcast %cst_58 : f32 to vector<16x256xf32>
    %98 = vector.extract_strided_slice %96 {offsets = [0, 0], sizes = [8, 256], strides = [1, 1]} : vector<8x290xf32> to vector<8x256xf32>
    %c0_59 = arith.constant 0 : index
    %c0_60 = arith.constant 0 : index
    %c0_61 = arith.constant 0 : index
    %99 = vector.load %arg6[%c0_59, %c0_60, %c0_61] : memref<9x1x256xf32, #tpu.memory_space<vmem>>, vector<1x1x256xf32>
    %100 = vector.shape_cast %99 : vector<1x1x256xf32> to vector<1x256xf32>
    %101 = vector.broadcast %100 : vector<1x256xf32> to vector<8x256xf32>
    %102 = arith.mulf %98, %101 : vector<8x256xf32>
    %c0_62 = arith.constant 0 : index
    %c0_63 = arith.constant 0 : index
    %c0_64 = arith.constant 0 : index
    %103 = vector.load %arg4[%c0_62, %c0_63, %c0_64] : memref<9x16x8xbf16, #tpu.memory_space<vmem>>, vector<1x16x8xbf16>
    %104 = vector.shape_cast %103 : vector<1x16x8xbf16> to vector<16x8xbf16>
    %105 = arith.truncf %102 : vector<8x256xf32> to vector<8x256xbf16>
    %cst_65 = arith.constant dense<0.000000e+00> : vector<16x256xf32>
    %106 = tpu.matmul %104, %105, %cst_65 {dimension_numbers = #tpu.dot_dimension_numbers<[1], [0], [0], [1], [0, 0, 1, 1], [], []>} : vector<16x8xbf16>, vector<8x256xbf16>, vector<16x256xf32> -> vector<16x256xf32>
    %107 = arith.addf %97, %106 : vector<16x256xf32>
    %108 = vector.extract_strided_slice %96 {offsets = [0, 1], sizes = [8, 256], strides = [1, 1]} : vector<8x290xf32> to vector<8x256xf32>
    %c1_66 = arith.constant 1 : index
    %c0_67 = arith.constant 0 : index
    %c0_68 = arith.constant 0 : index
    %109 = vector.load %arg6[%c1_66, %c0_67, %c0_68] : memref<9x1x256xf32, #tpu.memory_space<vmem>>, vector<1x1x256xf32>
    %110 = vector.shape_cast %109 : vector<1x1x256xf32> to vector<1x256xf32>
    %111 = vector.broadcast %110 : vector<1x256xf32> to vector<8x256xf32>
    %112 = arith.mulf %108, %111 : vector<8x256xf32>
    %c1_69 = arith.constant 1 : index
    %c0_70 = arith.constant 0 : index
    %c0_71 = arith.constant 0 : index
    %113 = vector.load %arg4[%c1_69, %c0_70, %c0_71] : memref<9x16x8xbf16, #tpu.memory_space<vmem>>, vector<1x16x8xbf16>
    %114 = vector.shape_cast %113 : vector<1x16x8xbf16> to vector<16x8xbf16>
    %115 = arith.truncf %112 : vector<8x256xf32> to vector<8x256xbf16>
    %cst_72 = arith.constant dense<0.000000e+00> : vector<16x256xf32>
    %116 = tpu.matmul %114, %115, %cst_72 {dimension_numbers = #tpu.dot_dimension_numbers<[1], [0], [0], [1], [0, 0, 1, 1], [], []>} : vector<16x8xbf16>, vector<8x256xbf16>, vector<16x256xf32> -> vector<16x256xf32>
    %117 = arith.addf %107, %116 : vector<16x256xf32>
    %118 = vector.extract_strided_slice %96 {offsets = [0, 2], sizes = [8, 256], strides = [1, 1]} : vector<8x290xf32> to vector<8x256xf32>
    %c2_73 = arith.constant 2 : index
    %c0_74 = arith.constant 0 : index
    %c0_75 = arith.constant 0 : index
    %119 = vector.load %arg6[%c2_73, %c0_74, %c0_75] : memref<9x1x256xf32, #tpu.memory_space<vmem>>, vector<1x1x256xf32>
    %120 = vector.shape_cast %119 : vector<1x1x256xf32> to vector<1x256xf32>
    %121 = vector.broadcast %120 : vector<1x256xf32> to vector<8x256xf32>
    %122 = arith.mulf %118, %121 : vector<8x256xf32>
    %c2_76 = arith.constant 2 : index
    %c0_77 = arith.constant 0 : index
    %c0_78 = arith.constant 0 : index
    %123 = vector.load %arg4[%c2_76, %c0_77, %c0_78] : memref<9x16x8xbf16, #tpu.memory_space<vmem>>, vector<1x16x8xbf16>
    %124 = vector.shape_cast %123 : vector<1x16x8xbf16> to vector<16x8xbf16>
    %125 = arith.truncf %122 : vector<8x256xf32> to vector<8x256xbf16>
    %cst_79 = arith.constant dense<0.000000e+00> : vector<16x256xf32>
    %126 = tpu.matmul %124, %125, %cst_79 {dimension_numbers = #tpu.dot_dimension_numbers<[1], [0], [0], [1], [0, 0, 1, 1], [], []>} : vector<16x8xbf16>, vector<8x256xbf16>, vector<16x256xf32> -> vector<16x256xf32>
    %127 = arith.addf %117, %126 : vector<16x256xf32>
    %128 = vector.extract_strided_slice %96 {offsets = [0, 16], sizes = [8, 256], strides = [1, 1]} : vector<8x290xf32> to vector<8x256xf32>
    %c3_80 = arith.constant 3 : index
    %c0_81 = arith.constant 0 : index
    %c0_82 = arith.constant 0 : index
    %129 = vector.load %arg6[%c3_80, %c0_81, %c0_82] : memref<9x1x256xf32, #tpu.memory_space<vmem>>, vector<1x1x256xf32>
    %130 = vector.shape_cast %129 : vector<1x1x256xf32> to vector<1x256xf32>
    %131 = vector.broadcast %130 : vector<1x256xf32> to vector<8x256xf32>
    %132 = arith.mulf %128, %131 : vector<8x256xf32>
    %c3_83 = arith.constant 3 : index
    %c0_84 = arith.constant 0 : index
    %c0_85 = arith.constant 0 : index
    %133 = vector.load %arg4[%c3_83, %c0_84, %c0_85] : memref<9x16x8xbf16, #tpu.memory_space<vmem>>, vector<1x16x8xbf16>
    %134 = vector.shape_cast %133 : vector<1x16x8xbf16> to vector<16x8xbf16>
    %135 = arith.truncf %132 : vector<8x256xf32> to vector<8x256xbf16>
    %cst_86 = arith.constant dense<0.000000e+00> : vector<16x256xf32>
    %136 = tpu.matmul %134, %135, %cst_86 {dimension_numbers = #tpu.dot_dimension_numbers<[1], [0], [0], [1], [0, 0, 1, 1], [], []>} : vector<16x8xbf16>, vector<8x256xbf16>, vector<16x256xf32> -> vector<16x256xf32>
    %137 = arith.addf %127, %136 : vector<16x256xf32>
    %138 = vector.extract_strided_slice %96 {offsets = [0, 17], sizes = [8, 256], strides = [1, 1]} : vector<8x290xf32> to vector<8x256xf32>
    %c4_87 = arith.constant 4 : index
    %c0_88 = arith.constant 0 : index
    %c0_89 = arith.constant 0 : index
    %139 = vector.load %arg4[%c4_87, %c0_88, %c0_89] : memref<9x16x8xbf16, #tpu.memory_space<vmem>>, vector<1x16x8xbf16>
    %140 = vector.shape_cast %139 : vector<1x16x8xbf16> to vector<16x8xbf16>
    %141 = arith.truncf %138 : vector<8x256xf32> to vector<8x256xbf16>
    %cst_90 = arith.constant dense<0.000000e+00> : vector<16x256xf32>
    %142 = tpu.matmul %140, %141, %cst_90 {dimension_numbers = #tpu.dot_dimension_numbers<[1], [0], [0], [1], [0, 0, 1, 1], [], []>} : vector<16x8xbf16>, vector<8x256xbf16>, vector<16x256xf32> -> vector<16x256xf32>
    %143 = arith.addf %137, %142 : vector<16x256xf32>
    %144 = vector.extract_strided_slice %96 {offsets = [0, 18], sizes = [8, 256], strides = [1, 1]} : vector<8x290xf32> to vector<8x256xf32>
    %c5_91 = arith.constant 5 : index
    %c0_92 = arith.constant 0 : index
    %c0_93 = arith.constant 0 : index
    %145 = vector.load %arg6[%c5_91, %c0_92, %c0_93] : memref<9x1x256xf32, #tpu.memory_space<vmem>>, vector<1x1x256xf32>
    %146 = vector.shape_cast %145 : vector<1x1x256xf32> to vector<1x256xf32>
    %147 = vector.broadcast %146 : vector<1x256xf32> to vector<8x256xf32>
    %148 = arith.mulf %144, %147 : vector<8x256xf32>
    %c5_94 = arith.constant 5 : index
    %c0_95 = arith.constant 0 : index
    %c0_96 = arith.constant 0 : index
    %149 = vector.load %arg4[%c5_94, %c0_95, %c0_96] : memref<9x16x8xbf16, #tpu.memory_space<vmem>>, vector<1x16x8xbf16>
    %150 = vector.shape_cast %149 : vector<1x16x8xbf16> to vector<16x8xbf16>
    %151 = arith.truncf %148 : vector<8x256xf32> to vector<8x256xbf16>
    %cst_97 = arith.constant dense<0.000000e+00> : vector<16x256xf32>
    %152 = tpu.matmul %150, %151, %cst_97 {dimension_numbers = #tpu.dot_dimension_numbers<[1], [0], [0], [1], [0, 0, 1, 1], [], []>} : vector<16x8xbf16>, vector<8x256xbf16>, vector<16x256xf32> -> vector<16x256xf32>
    %153 = arith.addf %143, %152 : vector<16x256xf32>
    %154 = vector.extract_strided_slice %96 {offsets = [0, 32], sizes = [8, 256], strides = [1, 1]} : vector<8x290xf32> to vector<8x256xf32>
    %c6_98 = arith.constant 6 : index
    %c0_99 = arith.constant 0 : index
    %c0_100 = arith.constant 0 : index
    %155 = vector.load %arg6[%c6_98, %c0_99, %c0_100] : memref<9x1x256xf32, #tpu.memory_space<vmem>>, vector<1x1x256xf32>
    %156 = vector.shape_cast %155 : vector<1x1x256xf32> to vector<1x256xf32>
    %157 = vector.broadcast %156 : vector<1x256xf32> to vector<8x256xf32>
    %158 = arith.mulf %154, %157 : vector<8x256xf32>
    %c6_101 = arith.constant 6 : index
    %c0_102 = arith.constant 0 : index
    %c0_103 = arith.constant 0 : index
    %159 = vector.load %arg4[%c6_101, %c0_102, %c0_103] : memref<9x16x8xbf16, #tpu.memory_space<vmem>>, vector<1x16x8xbf16>
    %160 = vector.shape_cast %159 : vector<1x16x8xbf16> to vector<16x8xbf16>
    %161 = arith.truncf %158 : vector<8x256xf32> to vector<8x256xbf16>
    %cst_104 = arith.constant dense<0.000000e+00> : vector<16x256xf32>
    %162 = tpu.matmul %160, %161, %cst_104 {dimension_numbers = #tpu.dot_dimension_numbers<[1], [0], [0], [1], [0, 0, 1, 1], [], []>} : vector<16x8xbf16>, vector<8x256xbf16>, vector<16x256xf32> -> vector<16x256xf32>
    %163 = arith.addf %153, %162 : vector<16x256xf32>
    %164 = vector.extract_strided_slice %96 {offsets = [0, 33], sizes = [8, 256], strides = [1, 1]} : vector<8x290xf32> to vector<8x256xf32>
    %c7_105 = arith.constant 7 : index
    %c0_106 = arith.constant 0 : index
    %c0_107 = arith.constant 0 : index
    %165 = vector.load %arg6[%c7_105, %c0_106, %c0_107] : memref<9x1x256xf32, #tpu.memory_space<vmem>>, vector<1x1x256xf32>
    %166 = vector.shape_cast %165 : vector<1x1x256xf32> to vector<1x256xf32>
    %167 = vector.broadcast %166 : vector<1x256xf32> to vector<8x256xf32>
    %168 = arith.mulf %164, %167 : vector<8x256xf32>
    %c7_108 = arith.constant 7 : index
    %c0_109 = arith.constant 0 : index
    %c0_110 = arith.constant 0 : index
    %169 = vector.load %arg4[%c7_108, %c0_109, %c0_110] : memref<9x16x8xbf16, #tpu.memory_space<vmem>>, vector<1x16x8xbf16>
    %170 = vector.shape_cast %169 : vector<1x16x8xbf16> to vector<16x8xbf16>
    %171 = arith.truncf %168 : vector<8x256xf32> to vector<8x256xbf16>
    %cst_111 = arith.constant dense<0.000000e+00> : vector<16x256xf32>
    %172 = tpu.matmul %170, %171, %cst_111 {dimension_numbers = #tpu.dot_dimension_numbers<[1], [0], [0], [1], [0, 0, 1, 1], [], []>} : vector<16x8xbf16>, vector<8x256xbf16>, vector<16x256xf32> -> vector<16x256xf32>
    %173 = arith.addf %163, %172 : vector<16x256xf32>
    %174 = vector.extract_strided_slice %96 {offsets = [0, 34], sizes = [8, 256], strides = [1, 1]} : vector<8x290xf32> to vector<8x256xf32>
    %c8_112 = arith.constant 8 : index
    %c0_113 = arith.constant 0 : index
    %c0_114 = arith.constant 0 : index
    %175 = vector.load %arg6[%c8_112, %c0_113, %c0_114] : memref<9x1x256xf32, #tpu.memory_space<vmem>>, vector<1x1x256xf32>
    %176 = vector.shape_cast %175 : vector<1x1x256xf32> to vector<1x256xf32>
    %177 = vector.broadcast %176 : vector<1x256xf32> to vector<8x256xf32>
    %178 = arith.mulf %174, %177 : vector<8x256xf32>
    %c8_115 = arith.constant 8 : index
    %c0_116 = arith.constant 0 : index
    %c0_117 = arith.constant 0 : index
    %179 = vector.load %arg4[%c8_115, %c0_116, %c0_117] : memref<9x16x8xbf16, #tpu.memory_space<vmem>>, vector<1x16x8xbf16>
    %180 = vector.shape_cast %179 : vector<1x16x8xbf16> to vector<16x8xbf16>
    %181 = arith.truncf %178 : vector<8x256xf32> to vector<8x256xbf16>
    %cst_118 = arith.constant dense<0.000000e+00> : vector<16x256xf32>
    %182 = tpu.matmul %180, %181, %cst_118 {dimension_numbers = #tpu.dot_dimension_numbers<[1], [0], [0], [1], [0, 0, 1, 1], [], []>} : vector<16x8xbf16>, vector<8x256xbf16>, vector<16x256xf32> -> vector<16x256xf32>
    %183 = arith.addf %173, %182 : vector<16x256xf32>
    %c0_119 = arith.constant 0 : index
    %c0_120 = arith.constant 0 : index
    %184 = vector.load %arg5[%c0_119, %c0_120] : memref<16x1xf32, #tpu.memory_space<vmem>>, vector<16x1xf32>
    %185 = vector.broadcast %184 : vector<16x1xf32> to vector<16x256xf32>
    %186 = arith.addf %183, %185 : vector<16x256xf32>
    %cst_121 = arith.constant 0.000000e+00 : f32
    %187 = vector.broadcast %cst_121 : f32 to vector<16x256xf32>
    %188 = arith.maximumf %186, %187 : vector<16x256xf32>
    %cst_122 = arith.constant dense<0.000000e+00> : vector<16xf32>
    %189 = vector.multi_reduction <add>, %188, %cst_122 [1] : vector<16x256xf32> to vector<16xf32>
    %190 = vector.shape_cast %189 : vector<16xf32> to vector<16x1xf32>
    %cst_123 = arith.constant 2.560000e+02 : f32
    %191 = vector.broadcast %cst_123 : f32 to vector<16x1xf32>
    %192 = arith.divf %190, %191 : vector<16x1xf32>
    %c0_124 = arith.constant 0 : index
    %c0_125 = arith.constant 0 : index
    %c0_126 = arith.constant 0 : index
    %193 = vector.load %arg7[%c0_124, %c0_125, %c0_126] : memref<1x16x1xf32, #tpu.memory_space<vmem>>, vector<1x16x1xf32>
    %194 = vector.shape_cast %193 : vector<1x16x1xf32> to vector<16x1xf32>
    %195 = vector.shape_cast %192 : vector<16x1xf32> to vector<1x16x1xf32>
    tpu.vector_store %arg7[%c0_124, %c0_125, %c0_126], %195 {strides = array<i32>} : memref<1x16x1xf32, #tpu.memory_space<vmem>>, vector<1x16x1xf32>,
    return
  }
  func.func @transform_0(%arg0: i32) -> (i32, i32, i32) {
    %c0_i32 = arith.constant 0 : i32
    %c0_i32_0 = arith.constant 0 : i32
    %c0_i32_1 = arith.constant 0 : i32
    return %arg0, %c0_i32, %c0_i32_0 : i32, i32, i32
  }
  func.func @transform_1(%arg0: i32) -> (i32, i32, i32) {
    %c0_i32 = arith.constant 0 : i32
    %c0_i32_0 = arith.constant 0 : i32
    %c0_i32_1 = arith.constant 0 : i32
    %c0_i32_2 = arith.constant 0 : i32
    return %c0_i32, %c0_i32_0, %c0_i32_1 : i32, i32, i32
  }
  func.func @transform_2(%arg0: i32) -> (i32, i32) {
    %c0_i32 = arith.constant 0 : i32
    %c0_i32_0 = arith.constant 0 : i32
    %c0_i32_1 = arith.constant 0 : i32
    return %c0_i32, %c0_i32_0 : i32, i32
  }
  func.func @transform_3(%arg0: i32) -> (i32, i32, i32) {
    %c0_i32 = arith.constant 0 : i32
    %c0_i32_0 = arith.constant 0 : i32
    %c0_i32_1 = arith.constant 0 : i32
    %c0_i32_2 = arith.constant 0 : i32
    return %c0_i32, %c0_i32_0, %c0_i32_1 : i32, i32, i32
  }
  func.func @transform_4(%arg0: i32) -> (i32, i32) {
    %c0_i32 = arith.constant 0 : i32
    %c0_i32_0 = arith.constant 0 : i32
    %c0_i32_1 = arith.constant 0 : i32
    return %c0_i32, %c0_i32_0 : i32, i32
  }
  func.func @transform_5(%arg0: i32) -> (i32, i32, i32) {
    %c0_i32 = arith.constant 0 : i32
    %c0_i32_0 = arith.constant 0 : i32
    %c0_i32_1 = arith.constant 0 : i32
    %c0_i32_2 = arith.constant 0 : i32
    return %c0_i32, %c0_i32_0, %c0_i32_1 : i32, i32, i32
  }
  func.func @transform_6(%arg0: i32) -> (i32, i32, i32) {
    %c0_i32 = arith.constant 0 : i32
    %c0_i32_0 = arith.constant 0 : i32
    %c0_i32_1 = arith.constant 0 : i32
    return %arg0, %c0_i32, %c0_i32_0 : i32, i32, i32
  }
}

</mosaic_0001>

<llo_original>
// kernel: tpu_custom_call.1
$region0: #{tpu_custom_call.1}
  #allocation0 [shape = 'u32[]', space=smem, size = 0x4, offset = 0x4, fixed_abs, tag = 'smem constant byte address 0x4 - core index']
  #allocation1 [shape = 'u32[144,128]{1,0:T(1,128)}', space=vmem, size = 0x12000, scoped, tag = 'internal scratch']
  %s0 = inlined_call_operand.vmem [shape: bf16[2,4,290], index: 0, kind: input, shape index: {}]
  %s1 = inlined_call_operand.vmem [shape: bf16[9,8,4], index: 1, kind: input, shape index: {}]
  %s2 = inlined_call_operand.vmem [shape: f32[8,1], index: 2, kind: input, shape index: {}]
  %s3 = inlined_call_operand.vmem [shape: bf16[9,16,8], index: 3, kind: input, shape index: {}]
  %s4 = inlined_call_operand.vmem [shape: f32[16,1], index: 4, kind: input, shape index: {}]
  %s5 = inlined_call_operand.vmem [shape: f32[9,1,256], index: 5, kind: input, shape index: {}]
  %s6 = inlined_call_operand.vmem [shape: f32[2,16,1], index: 6, kind: output, shape index: {}]
  %s7 = sld [smem:[#allocation0]]
  $region57: #{tpu_custom_call.1} parent=0
    _
  %s9 = ssub.s32 1, %s7
  %s10 = scalar_select 0, %s9, %s7
  loop: start=0, step=1, limit=4
  $region2: #{tpu_custom_call.1} parent=0 // loop_pre_header
    _
  $region3: #{tpu_custom_call.1} parent=0 // loop_header
    %s12 = sphi 0, %s16
    %p13 = scmp.ge.s32.totalorder %s12, 4
    %s22 = sphi 0, %s24
    %s25 = sphi 0, %s22
    %s26 = sphi 0, %s25
    %s42 = sphi 0, %s26
    %s46 = sphi 0, %s46
    %s48 = sphi 0, %s46
    %s49 = sphi 0, %s48
    %s63 = sphi 0, %s49
    %s67 = sphi 0, %s67
    %s69 = sphi 0, %s67
    %s70 = sphi 0, %s69
    %s84 = sphi 0, %s70
    %s88 = sphi 0, %s88
    %s90 = sphi 0, %s88
    %s91 = sphi 0, %s90
    %s105 = sphi 0, %s91
    %s109 = sphi 0, %s109
    %s111 = sphi 0, %s109
    %s112 = sphi 0, %s111
    %s126 = sphi 0, %s112
    %s130 = sphi 0, %s130
    %s132 = sphi 0, %s130
    %s133 = sphi 0, %s132
    %s147 = sphi 0, %s133
    %s153 = sphi 0, %s155
    %s156 = sphi 0, %s153
    %s157 = sphi 0, %s156
    %s173 = sphi 0, %s157
  $region4: #{tpu_custom_call.1} parent=0 // loop_header_branch
    %15 = sbr.rel (%p13) target = $region8
  $region5: #{tpu_custom_call.1} parent=0 // loop_body
    %s17 = ssub.s32 %s12, 1
    %s18 = ssub.s32 %s12, 2
    %s19 = sadd.s32 %s12, 1
    %s20 = ssub.s32 %s12, %s19
    %p21 = scmp.eq.s32.totalorder %s20, 0
    %s23 = sadd.s32 %s22, 1
    %s24 = scalar_select %p21, %s22, %s23
    %p27 = pneg %p21
    %p28 = scmp.eq.s32.totalorder %s12, 1
    %p29 = por %p27, %p28
    %p30 = scmp.ne.s32.totalorder %s22, %s25
    %p31 = scmp.eq.s32.totalorder %s12, 0
    %p32 = por %p30, %p31
    %p33 = scmp.ne.s32.totalorder %s22, %s25
    %p34 = scmp.eq.s32.totalorder %s17, 1
    %p35 = por %p33, %p34
    %p36 = scmp.ne.s32.totalorder %s25, %s26
    %p37 = scmp.eq.s32.totalorder %s17, 0
    %p38 = por %p36, %p37
    %p39 = scmp.ne.s32.totalorder %s25, %s26
    %p40 = scmp.eq.s32.totalorder %s18, 1
    %p41 = por %p39, %p40
    %p43 = scmp.ne.s32.totalorder %s26, %s42
    %p44 = scmp.eq.s32.totalorder %s18, 0
    %p45 = por %p43, %p44
    %s47 = sadd.s32 %s46, 1
    %p50 = scmp.eq.s32.totalorder %s12, 1
    %p51 = scmp.ne.s32.totalorder %s46, %s48
    %p52 = scmp.eq.s32.totalorder %s12, 0
    %p53 = por %p51, %p52
    %p54 = scmp.ne.s32.totalorder %s46, %s48
    %p55 = scmp.eq.s32.totalorder %s17, 1
    %p56 = por %p54, %p55
    %p57 = scmp.ne.s32.totalorder %s48, %s49
    %p58 = scmp.eq.s32.totalorder %s17, 0
    %p59 = por %p57, %p58
    %p60 = scmp.ne.s32.totalorder %s48, %s49
    %p61 = scmp.eq.s32.totalorder %s18, 1
    %p62 = por %p60, %p61
    %p64 = scmp.ne.s32.totalorder %s49, %s63
    %p65 = scmp.eq.s32.totalorder %s18, 0
    %p66 = por %p64, %p65
    %s68 = sadd.s32 %s67, 1
    %p71 = scmp.eq.s32.totalorder %s12, 1
    %p72 = scmp.ne.s32.totalorder %s67, %s69
    %p73 = scmp.eq.s32.totalorder %s12, 0
    %p74 = por %p72, %p73
    %p75 = scmp.ne.s32.totalorder %s67, %s69
    %p76 = scmp.eq.s32.totalorder %s17, 1
    %p77 = por %p75, %p76
    %p78 = scmp.ne.s32.totalorder %s69, %s70
    %p79 = scmp.eq.s32.totalorder %s17, 0
    %p80 = por %p78, %p79
    %p81 = scmp.ne.s32.totalorder %s69, %s70
    %p82 = scmp.eq.s32.totalorder %s18, 1
    %p83 = por %p81, %p82
    %p85 = scmp.ne.s32.totalorder %s70, %s84
    %p86 = scmp.eq.s32.totalorder %s18, 0
    %p87 = por %p85, %p86
    %s89 = sadd.s32 %s88, 1
    %p92 = scmp.eq.s32.totalorder %s12, 1
    %p93 = scmp.ne.s32.totalorder %s88, %s90
    %p94 = scmp.eq.s32.totalorder %s12, 0
    %p95 = por %p93, %p94
    %p96 = scmp.ne.s32.totalorder %s88, %s90
    %p97 = scmp.eq.s32.totalorder %s17, 1
    %p98 = por %p96, %p97
    %p99 = scmp.ne.s32.totalorder %s90, %s91
    %p100 = scmp.eq.s32.totalorder %s17, 0
    %p101 = por %p99, %p100
    %p102 = scmp.ne.s32.totalorder %s90, %s91
    %p103 = scmp.eq.s32.totalorder %s18, 1
    %p104 = por %p102, %p103
    %p106 = scmp.ne.s32.totalorder %s91, %s105
    %p107 = scmp.eq.s32.totalorder %s18, 0
    %p108 = por %p106, %p107
    %s110 = sadd.s32 %s109, 1
    %p113 = scmp.eq.s32.totalorder %s12, 1
    %p114 = scmp.ne.s32.totalorder %s109, %s111
    %p115 = scmp.eq.s32.totalorder %s12, 0
    %p116 = por %p114, %p115
    %p117 = scmp.ne.s32.totalorder %s109, %s111
    %p118 = scmp.eq.s32.totalorder %s17, 1
    %p119 = por %p117, %p118
    %p120 = scmp.ne.s32.totalorder %s111, %s112
    %p121 = scmp.eq.s32.totalorder %s17, 0
    %p122 = por %p120, %p121
    %p123 = scmp.ne.s32.totalorder %s111, %s112
    %p124 = scmp.eq.s32.totalorder %s18, 1
    %p125 = por %p123, %p124
    %p127 = scmp.ne.s32.totalorder %s112, %s126
    %p128 = scmp.eq.s32.totalorder %s18, 0
    %p129 = por %p127, %p128
    %s131 = sadd.s32 %s130, 1
    %p134 = scmp.eq.s32.totalorder %s12, 1
    %p135 = scmp.ne.s32.totalorder %s130, %s132
    %p136 = scmp.eq.s32.totalorder %s12, 0
    %p137 = por %p135, %p136
    %p138 = scmp.ne.s32.totalorder %s130, %s132
    %p139 = scmp.eq.s32.totalorder %s17, 1
    %p140 = por %p138, %p139
    %p141 = scmp.ne.s32.totalorder %s132, %s133
    %p142 = scmp.eq.s32.totalorder %s17, 0
    %p143 = por %p141, %p142
    %p144 = scmp.ne.s32.totalorder %s132, %s133
    %p145 = scmp.eq.s32.totalorder %s18, 1
    %p146 = por %p144, %p145
    %p148 = scmp.ne.s32.totalorder %s133, %s147
    %p149 = scmp.eq.s32.totalorder %s18, 0
    %p150 = por %p148, %p149
    %s151 = ssub.s32 %s12, %s19
    %p152 = scmp.eq.s32.totalorder %s151, 0
    %s154 = sadd.s32 %s153, 1
    %s155 = scalar_select %p152, %s153, %s154
    %p158 = pneg %p152
    %p159 = scmp.eq.s32.totalorder %s12, 1
    %p160 = por %p158, %p159
    %p161 = scmp.ne.s32.totalorder %s153, %s156
    %p162 = scmp.eq.s32.totalorder %s12, 0
    %p163 = por %p161, %p162
    %p164 = scmp.ne.s32.totalorder %s153, %s156
    %p165 = scmp.eq.s32.totalorder %s17, 1
    %p166 = por %p164, %p165
    %p167 = scmp.ne.s32.totalorder %s156, %s157
    %p168 = scmp.eq.s32.totalorder %s17, 0
    %p169 = por %p167, %p168
    %p170 = scmp.ne.s32.totalorder %s156, %s157
    %p171 = scmp.eq.s32.totalorder %s18, 1
    %p172 = por %p170, %p171
    %p174 = scmp.ne.s32.totalorder %s157, %s173
    %p175 = scmp.eq.s32.totalorder %s18, 0
    %p176 = por %p174, %p175
    %p177 = scmp.le.s32.totalorder 1, %s12
    %p178 = scmp.lt.s32.totalorder %s12, 3
    %p179 = pnand %p177, %p178
    %p180 = pneg %p179
    // Predicated region
    $region9: #{tpu_custom_call.1} parent=5 // pred_check
      _
    $region10: #{tpu_custom_call.1} parent=5 // pred_check_branch
      %182 = sbr.rel (%p179) target = $region12
    $region11: #{tpu_custom_call.1} parent=5 // pred_region
      %s183 = ssub.s32 %s12, 1
      // Predicated region
      $region13: #{tpu_custom_call.1} parent=11 // pred_check
        %p184 = pneg %p59
      $region14: #{tpu_custom_call.1} parent=11 // pred_check_branch
        %186 = sbr.rel (%p184) target = $region16
      $region15: #{tpu_custom_call.1} parent=11 // pred_region
        _
      $region16: #{tpu_custom_call.1} parent=11 // pred_fallthru
        _
      // Predicated region
      $region17: #{tpu_custom_call.1} parent=11 // pred_check
        %p187 = pneg %p80
      $region18: #{tpu_custom_call.1} parent=11 // pred_check_branch
        %189 = sbr.rel (%p187) target = $region20
      $region19: #{tpu_custom_call.1} parent=11 // pred_region
        _
      $region20: #{tpu_custom_call.1} parent=11 // pred_fallthru
        _
      // Predicated region
      $region21: #{tpu_custom_call.1} parent=11 // pred_check
        %p190 = pneg %p101
      $region22: #{tpu_custom_call.1} parent=11 // pred_check_branch
        %192 = sbr.rel (%p190) target = $region24
      $region23: #{tpu_custom_call.1} parent=11 // pred_region
        _
      $region24: #{tpu_custom_call.1} parent=11 // pred_fallthru
        _
      // Predicated region
      $region25: #{tpu_custom_call.1} parent=11 // pred_check
        %p193 = pneg %p122
      $region26: #{tpu_custom_call.1} parent=11 // pred_check_branch
        %195 = sbr.rel (%p193) target = $region28
      $region27: #{tpu_custom_call.1} parent=11 // pred_region
        _
      $region28: #{tpu_custom_call.1} parent=11 // pred_fallthru
        _
      // Predicated region
      $region29: #{tpu_custom_call.1} parent=11 // pred_check
        %p196 = pneg %p143
      $region30: #{tpu_custom_call.1} parent=11 // pred_check_branch
        %198 = sbr.rel (%p196) target = $region32
      $region31: #{tpu_custom_call.1} parent=11 // pred_region
        _
      $region32: #{tpu_custom_call.1} parent=11 // pred_fallthru
        _
    $region12: #{tpu_custom_call.1} parent=5 // pred_fallthru
      _
    %p199 = scmp.lt.s32.totalorder %s12, 2
    // Predicated region
    $region33: #{tpu_custom_call.1} parent=5 // pred_check
      %p200 = pneg %p199
    $region34: #{tpu_custom_call.1} parent=5 // pred_check_branch
      %202 = sbr.rel (%p200) target = $region36
    $region35: #{tpu_custom_call.1} parent=5 // pred_region
      // Predicated region
      $region37: #{tpu_custom_call.1} parent=35 // pred_check
        %p203 = pneg %p32
      $region38: #{tpu_custom_call.1} parent=35 // pred_check_branch
        %205 = sbr.rel (%p203) target = $region40
      $region39: #{tpu_custom_call.1} parent=35 // pred_region
        %p206 = scmp.lt.s32.totalorder %s12, 1
        %s207 = scalar_select %p206, %s12, 1
        %s208 = smul.addr %s207, 3
        %s209 = smul.addr %s208, 2
        %s210 = scalar_lea.vmem %s0, %s209
      $region40: #{tpu_custom_call.1} parent=35 // pred_fallthru
        _
    $region36: #{tpu_custom_call.1} parent=5 // pred_fallthru
      _
    %p211 = scmp.le.s32.totalorder 1, %s12
    %p212 = scmp.lt.s32.totalorder %s12, 3
    %p213 = pnand %p211, %p212
    %p214 = pneg %p213
    // Predicated region
    $region41: #{tpu_custom_call.1} parent=5 // pred_check
      _
    $region42: #{tpu_custom_call.1} parent=5 // pred_check_branch
      %216 = sbr.rel (%p213) target = $region44
    $region43: #{tpu_custom_call.1} parent=5 // pred_region
      %s217 = ssub.s32 %s12, 1
      %p218 = scmp.lt.s32.totalorder %s17, 1
      %s219 = scalar_select %p218, %s17, 1
      %s220 = smul.addr %s219, 3
      %s221 = smul.addr %s220, 2
      %s222 = scalar_lea.vmem %s0, %s221
      %p223 = pneg %p38
      %p224 = pneg %p35
      %p225 = pneg %p59
      %p226 = pneg %p56
      %p227 = pneg %p80
      %p228 = pneg %p77
      %p229 = pneg %p101
      %p230 = pneg %p98
      %p231 = pneg %p122
      %p232 = pneg %p119
      %p233 = pneg %p143
      %p234 = pneg %p140
      %p235 = pneg %p169
      %p236 = pneg %p166
      %p237 = scmp.lt.s32.totalorder %s17, 1
      %s238 = scalar_select %p237, %s17, 1
      %s239 = smul.addr %s238, 2
      %s240 = smul.addr %s239, 8
      %s241 = scalar_lea.vmem %s6, %s240
      %p242 = scmp.lt.s32.totalorder %s17, 1
      %s243 = scalar_select %p242, %s17, 1
      %s244 = smul.addr %s243, 3
      %s245 = smul.addr %s244, 2
      %s246 = scalar_lea.vmem %s0, %s245
      %p247 = scmp.lt.s32.totalorder %s17, 1
      %s248 = scalar_select %p247, %s17, 1
      %s249 = smul.addr %s248, 2
      %s250 = smul.addr %s249, 8
      %s251 = scalar_lea.vmem %s6, %s250
      %v253 = vld [vmem:[%s246] sm:$0x3f]
      %v254 = vunpack.c.l.bf16 %v253
      %v255 = vunpack.c.h.bf16 %v253
      %v256 = vld [vmem:[%s5] sm:$0x3]
      %v258 = vlaneseq
      %v259 = vshrl.u32 %v258, 7
      %v260 = vsub.s32 0, %v259
      %v261 = vrot.slane %v256, %v260
      %v262 = vlaneseq
      %v263 = vshrl.u32 %v262, 7
      %v264 = vsub.s32 1, %v263
      %v265 = vrot.slane %v256, %v264
      %v266 = vcombine.low %v261, %v265
      %v268 = vmul.f32 %v254, %v266
      %v269 = vld [vmem:[%s1] sm:$0xf]
      %v271 = vcombine.high %v268, %v268
      %v273 = vpack.c.bf16 %v268, %v268
      %v274 = vpack.c.bf16 %v271, %v271
      %s275 = scalar_lea.vmem %s5, 2
      %v276 = vld [vmem:[%s275] sm:$0x3]
      %v278 = vlaneseq
      %v279 = vshrl.u32 %v278, 7
      %v280 = vsub.s32 0, %v279
      %v281 = vrot.slane %v276, %v280
      %v282 = vlaneseq
      %v283 = vshrl.u32 %v282, 7
      %v284 = vsub.s32 1, %v283
      %v285 = vrot.slane %v276, %v284
      %v286 = vcombine.low %v281, %v285
      %287 = vrot.lane.b32.xlu0 %v286, 1
      %v288 = vpop.permute.xlu0 %287
      %v289 = vrot.slane %v288, 4
      %vm290 = vcmask 7168
      %v291 = vsel %vm290, %v289, %v288
      %v294 = vmul.f32 %v254, %v291
      %v295 = vmul.f32 %v255, %v289
      %s296 = scalar_lea.vmem %s1, 4
      %v297 = vld [vmem:[%s296] sm:$0xf]
      %v299 = vcombine.high %v294, %v294
      %v301 = vpack.c.bf16 %v294, %v294
      %v302 = vpack.c.bf16 %v299, %v299
      %v303 = vpack.c.bf16 %v295, %v295
      %307 = vrot.lane.b32.xlu0 %v301, 127
      %v308 = vpop.permute.xlu0 %307
      %309 = vrot.lane.b32.xlu0 %v302, 127
      %v310 = vpop.permute.xlu0 %309
      %311 = vrot.lane.b32.xlu0 %v303, 127
      %v312 = vpop.permute.xlu0 %311
      %vm313 = vcmask 1039360
      %v314 = vsel %vm313, %v308, %v310
      %v315 = vsel %vm313, %v310, %v312
      %vm316 = vcmask 31744
      %v318 = vsel %vm316, %v297, 0
      %vm320 = vcmask 1041408
      %v322 = vsel %vm320, %v314, 0
      %v325 = vsel %vm320, %v315, 0
      %327 = vmatprep.subr.bf16.mxu0 0
      %328 = vmatpush1.bf16.msra.mxu0 0
      %329 = vmatprep.subr.bf16.mxu0 0
      %330 = vmatpush1.bf16.msra.mxu0 0
      %331 = vmatprep.subr.bf16.mxu0 0
      %332 = vmatpush1.bf16.msra.mxu0 0
      %333 = vmatprep.subr.bf16.mxu0 0
      %334 = vmatpush1.bf16.msra.mxu0 0
      %335 = vmatprep.subr.bf16.mxu0 0
      %336 = vmatpush1.bf16.msra.mxu0 0
      %337 = vmatprep.subr.bf16.mxu0 0
      %338 = vmatpush1.bf16.msra.mxu0 0
      %339 = vmatprep.subr.bf16.mxu0 0
      %340 = vmatpush1.bf16.msra.mxu0 0
      %341 = vmatprep.subr.bf16.mxu0 %v325
      %342 = vmatpush1.bf16.msra.mxu0 %v322
      %343 = vmatprep.subr.bf16.mxu0 0
      %344 = vmatpush2.bf16.msra.mxu0 0
      %345 = vmatprep.subr.bf16.mxu0 0
      %346 = vmatpush2.bf16.msra.mxu0 0
      %347 = vmatprep.subr.bf16.mxu0 0
      %348 = vmatpush2.bf16.msra.mxu0 0
      %349 = vmatprep.subr.bf16.mxu0 0
      %350 = vmatpush2.bf16.msra.mxu0 0
      %351 = vmatprep.subr.bf16.mxu0 0
      %352 = vmatpush2.bf16.msra.mxu0 0
      %353 = vmatprep.subr.bf16.mxu0 0
      %354 = vmatpush2.bf16.msra.mxu0 0
      %355 = vmatprep.subr.bf16.mxu0 0
      %356 = vmatpush2.bf16.msra.mxu0 0
      %357 = vmatprep.subr.bf16.mxu0 0
      %358 = vmatpush2.bf16.msra.mxu0 0
      %359 = vmatprep.mubr.bf16.mxu0 0
      %360 = vmatmul.mubr.bf16.gmra.mxu0 %v318
      %v361 = vpop.f32.mrf.mxu0
      %v362 = vadd.f32 0.0, %v361
      %v363 = vpop.f32.mrf.mxu0
      %v364 = vadd.f32 0.0, %v363
      %v365 = vpop.f32.mrf.mxu0
      %v366 = vpop.f32.mrf.mxu0
      %367 = vdwg.mxu0
      %v369 = vsel %vm316, %v269, 0
      %v372 = vsel %vm320, %v273, 0
      %v375 = vsel %vm320, %v274, 0
      %377 = vmatprep.subr.bf16.mxu0 0
      %378 = vmatpush1.bf16.msra.mxu0 0
      %379 = vmatprep.subr.bf16.mxu0 0
      %380 = vmatpush1.bf16.msra.mxu0 0
      %381 = vmatprep.subr.bf16.mxu0 0
      %382 = vmatpush1.bf16.msra.mxu0 0
      %383 = vmatprep.subr.bf16.mxu0 0
      %384 = vmatpush1.bf16.msra.mxu0 0
      %385 = vmatprep.subr.bf16.mxu0 0
      %386 = vmatpush1.bf16.msra.mxu0 0
      %387 = vmatprep.subr.bf16.mxu0 0
      %388 = vmatpush1.bf16.msra.mxu0 0
      %389 = vmatprep.subr.bf16.mxu0 0
      %390 = vmatpush1.bf16.msra.mxu0 0
      %391 = vmatprep.subr.bf16.mxu0 %v375
      %392 = vmatpush1.bf16.msra.mxu0 %v372
      %393 = vmatprep.subr.bf16.mxu0 0
      %394 = vmatpush2.bf16.msra.mxu0 0
      %395 = vmatprep.subr.bf16.mxu0 0
      %396 = vmatpush2.bf16.msra.mxu0 0
      %397 = vmatprep.subr.bf16.mxu0 0
      %398 = vmatpush2.bf16.msra.mxu0 0
      %399 = vmatprep.subr.bf16.mxu0 0
      %400 = vmatpush2.bf16.msra.mxu0 0
      %401 = vmatprep.subr.bf16.mxu0 0
      %402 = vmatpush2.bf16.msra.mxu0 0
      %403 = vmatprep.subr.bf16.mxu0 0
      %404 = vmatpush2.bf16.msra.mxu0 0
      %405 = vmatprep.subr.bf16.mxu0 0
      %406 = vmatpush2.bf16.msra.mxu0 0
      %407 = vmatprep.subr.bf16.mxu0 0
      %408 = vmatpush2.bf16.msra.mxu0 0
      %409 = vmatprep.mubr.bf16.mxu0 0
      %410 = vmatmul.mubr.bf16.gmra.mxu0 %v369
      %v411 = vpop.f32.mrf.mxu0
      %v412 = vadd.f32 %v362, %v411
      %v413 = vpop.f32.mrf.mxu0
      %v414 = vadd.f32 %v364, %v413
      %v415 = vpop.f32.mrf.mxu0
      %v416 = vpop.f32.mrf.mxu0
      %417 = vdwg.mxu0
      %s418 = scalar_lea.vmem %s5, 4
      %v419 = vld [vmem:[%s418] sm:$0x3]
      %v421 = vlaneseq
      %v422 = vshrl.u32 %v421, 7
      %v423 = vsub.s32 0, %v422
      %v424 = vrot.slane %v419, %v423
      %v425 = vlaneseq
      %v426 = vshrl.u32 %v425, 7
      %v427 = vsub.s32 1, %v426
      %v428 = vrot.slane %v419, %v427
      %v429 = vcombine.low %v424, %v428
      %430 = vrot.lane.b32.xlu0 %v429, 2
      %v431 = vpop.permute.xlu0 %430
      %v432 = vrot.slane %v431, 4
      %vm433 = vcmask 15360
      %v434 = vsel %vm433, %v432, %v431
      %v437 = vmul.f32 %v254, %v434
      %v438 = vmul.f32 %v255, %v432
      %s439 = scalar_lea.vmem %s1, 8
      %v440 = vld [vmem:[%s439] sm:$0xf]
      %v442 = vcombine.high %v437, %v437
      %v444 = vpack.c.bf16 %v437, %v437
      %v445 = vpack.c.bf16 %v442, %v442
      %v446 = vpack.c.bf16 %v438, %v438
      %450 = vrot.lane.b32.xlu0 %v444, 126
      %v451 = vpop.permute.xlu0 %450
      %452 = vrot.lane.b32.xlu0 %v445, 126
      %v453 = vpop.permute.xlu0 %452
      %454 = vrot.lane.b32.xlu0 %v446, 126
      %v455 = vpop.permute.xlu0 %454
      %vm456 = vcmask 1031168
      %v457 = vsel %vm456, %v451, %v453
      %v458 = vsel %vm456, %v453, %v455
      %v460 = vsel %vm316, %v440, 0
      %v463 = vsel %vm320, %v457, 0
      %v466 = vsel %vm320, %v458, 0
      %468 = vmatprep.subr.bf16.mxu0 0
      %469 = vmatpush1.bf16.msra.mxu0 0
      %470 = vmatprep.subr.bf16.mxu0 0
      %471 = vmatpush1.bf16.msra.mxu0 0
      %472 = vmatprep.subr.bf16.mxu0 0
      %473 = vmatpush1.bf16.msra.mxu0 0
      %474 = vmatprep.subr.bf16.mxu0 0
      %475 = vmatpush1.bf16.msra.mxu0 0
      %476 = vmatprep.subr.bf16.mxu0 0
      %477 = vmatpush1.bf16.msra.mxu0 0
      %478 = vmatprep.subr.bf16.mxu0 0
      %479 = vmatpush1.bf16.msra.mxu0 0
      %480 = vmatprep.subr.bf16.mxu0 0
      %481 = vmatpush1.bf16.msra.mxu0 0
      %482 = vmatprep.subr.bf16.mxu0 %v466
      %483 = vmatpush1.bf16.msra.mxu0 %v463
      %484 = vmatprep.subr.bf16.mxu0 0
      %485 = vmatpush2.bf16.msra.mxu0 0
      %486 = vmatprep.subr.bf16.mxu0 0
      %487 = vmatpush2.bf16.msra.mxu0 0
      %488 = vmatprep.subr.bf16.mxu0 0
      %489 = vmatpush2.bf16.msra.mxu0 0
      %490 = vmatprep.subr.bf16.mxu0 0
      %491 = vmatpush2.bf16.msra.mxu0 0
      %492 = vmatprep.subr.bf16.mxu0 0
      %493 = vmatpush2.bf16.msra.mxu0 0
      %494 = vmatprep.subr.bf16.mxu0 0
      %495 = vmatpush2.bf16.msra.mxu0 0
      %496 = vmatprep.subr.bf16.mxu0 0
      %497 = vmatpush2.bf16.msra.mxu0 0
      %498 = vmatprep.subr.bf16.mxu0 0
      %499 = vmatpush2.bf16.msra.mxu0 0
      %500 = vmatprep.mubr.bf16.mxu0 0
      %501 = vmatmul.mubr.bf16.gmra.mxu0 %v460
      %v502 = vpop.f32.mrf.mxu0
      %v503 = vadd.f32 0.0, %v502
      %v504 = vpop.f32.mrf.mxu0
      %v505 = vadd.f32 0.0, %v504
      %v506 = vpop.f32.mrf.mxu0
      %v507 = vpop.f32.mrf.mxu0
      %508 = vdwg.mxu0
      %v509 = vadd.f32 %v412, %v503
      %v510 = vadd.f32 %v414, %v505
      %s511 = scalar_lea.vmem %s5, 6
      %v512 = vld [vmem:[%s511] sm:$0x3]
      %v514 = vlaneseq
      %v515 = vshrl.u32 %v514, 7
      %v516 = vsub.s32 0, %v515
      %v517 = vrot.slane %v512, %v516
      %v518 = vlaneseq
      %v519 = vshrl.u32 %v518, 7
      %v520 = vsub.s32 1, %v519
      %v521 = vrot.slane %v512, %v520
      %v522 = vcombine.low %v517, %v521
      %523 = vrot.lane.b32.xlu0 %v522, 16
      %v524 = vpop.permute.xlu0 %523
      %v525 = vrot.slane %v524, 4
      %vm526 = vcmask 130048
      %v527 = vsel %vm526, %v525, %v524
      %v530 = vmul.f32 %v254, %v527
      %v531 = vmul.f32 %v255, %v525
      %s532 = scalar_lea.vmem %s1, 12
      %v533 = vld [vmem:[%s532] sm:$0xf]
      %v535 = vcombine.high %v530, %v530
      %v537 = vpack.c.bf16 %v530, %v530
      %v538 = vpack.c.bf16 %v535, %v535
      %v539 = vpack.c.bf16 %v531, %v531
      %543 = vrot.lane.b32.xlu0 %v537, 112
      %v544 = vpop.permute.xlu0 %543
      %545 = vrot.lane.b32.xlu0 %v538, 112
      %v546 = vpop.permute.xlu0 %545
      %547 = vrot.lane.b32.xlu0 %v539, 112
      %v548 = vpop.permute.xlu0 %547
      %vm549 = vcmask 916480
      %v550 = vsel %vm549, %v544, %v546
      %v551 = vsel %vm549, %v546, %v548
      %v553 = vsel %vm316, %v533, 0
      %v556 = vsel %vm320, %v550, 0
      %v559 = vsel %vm320, %v551, 0
      %561 = vmatprep.subr.bf16.mxu0 0
      %562 = vmatpush1.bf16.msra.mxu0 0
      %563 = vmatprep.subr.bf16.mxu0 0
      %564 = vmatpush1.bf16.msra.mxu0 0
      %565 = vmatprep.subr.bf16.mxu0 0
      %566 = vmatpush1.bf16.msra.mxu0 0
      %567 = vmatprep.subr.bf16.mxu0 0
      %568 = vmatpush1.bf16.msra.mxu0 0
      %569 = vmatprep.subr.bf16.mxu0 0
      %570 = vmatpush1.bf16.msra.mxu0 0
      %571 = vmatprep.subr.bf16.mxu0 0
      %572 = vmatpush1.bf16.msra.mxu0 0
      %573 = vmatprep.subr.bf16.mxu0 0
      %574 = vmatpush1.bf16.msra.mxu0 0
      %575 = vmatprep.subr.bf16.mxu0 %v559
      %576 = vmatpush1.bf16.msra.mxu0 %v556
      %577 = vmatprep.subr.bf16.mxu0 0
      %578 = vmatpush2.bf16.msra.mxu0 0
      %579 = vmatprep.subr.bf16.mxu0 0
      %580 = vmatpush2.bf16.msra.mxu0 0
      %581 = vmatprep.subr.bf16.mxu0 0
      %582 = vmatpush2.bf16.msra.mxu0 0
      %583 = vmatprep.subr.bf16.mxu0 0
      %584 = vmatpush2.bf16.msra.mxu0 0
      %585 = vmatprep.subr.bf16.mxu0 0
      %586 = vmatpush2.bf16.msra.mxu0 0
      %587 = vmatprep.subr.bf16.mxu0 0
      %588 = vmatpush2.bf16.msra.mxu0 0
      %589 = vmatprep.subr.bf16.mxu0 0
      %590 = vmatpush2.bf16.msra.mxu0 0
      %591 = vmatprep.subr.bf16.mxu0 0
      %592 = vmatpush2.bf16.msra.mxu0 0
      %593 = vmatprep.mubr.bf16.mxu0 0
      %594 = vmatmul.mubr.bf16.gmra.mxu0 %v553
      %v595 = vpop.f32.mrf.mxu0
      %v596 = vadd.f32 0.0, %v595
      %v597 = vpop.f32.mrf.mxu0
      %v598 = vadd.f32 0.0, %v597
      %v599 = vpop.f32.mrf.mxu0
      %v600 = vpop.f32.mrf.mxu0
      %601 = vdwg.mxu0
      %v602 = vadd.f32 %v509, %v596
      %v603 = vadd.f32 %v510, %v598
      %s604 = scalar_lea.vmem %s1, 16
      %v605 = vld [vmem:[%s604] sm:$0xf]
      %v607 = vcombine.high %v254, %v254
      %v609 = vpack.c.bf16 %v254, %v254
      %v610 = vpack.c.bf16 %v607, %v607
      %v611 = vpack.c.bf16 %v255, %v255
      %615 = vrot.lane.b32.xlu0 %v609, 111
      %v616 = vpop.permute.xlu0 %615
      %617 = vrot.lane.b32.xlu0 %v610, 111
      %v618 = vpop.permute.xlu0 %617
      %619 = vrot.lane.b32.xlu0 %v611, 111
      %v620 = vpop.permute.xlu0 %619
      %vm621 = vcmask 908288
      %v622 = vsel %vm621, %v616, %v618
      %v623 = vsel %vm621, %v618, %v620
      %v625 = vsel %vm316, %v605, 0
      %v628 = vsel %vm320, %v622, 0
      %v631 = vsel %vm320, %v623, 0
      %633 = vmatprep.subr.bf16.mxu0 0
      %634 = vmatpush1.bf16.msra.mxu0 0
      %635 = vmatprep.subr.bf16.mxu0 0
      %636 = vmatpush1.bf16.msra.mxu0 0
      %637 = vmatprep.subr.bf16.mxu0 0
      %638 = vmatpush1.bf16.msra.mxu0 0
      %639 = vmatprep.subr.bf16.mxu0 0
      %640 = vmatpush1.bf16.msra.mxu0 0
      %641 = vmatprep.subr.bf16.mxu0 0
      %642 = vmatpush1.bf16.msra.mxu0 0
      %643 = vmatprep.subr.bf16.mxu0 0
      %644 = vmatpush1.bf16.msra.mxu0 0
      %645 = vmatprep.subr.bf16.mxu0 0
      %646 = vmatpush1.bf16.msra.mxu0 0
      %647 = vmatprep.subr.bf16.mxu0 %v631
      %648 = vmatpush1.bf16.msra.mxu0 %v628
      %649 = vmatprep.subr.bf16.mxu0 0
      %650 = vmatpush2.bf16.msra.mxu0 0
      %651 = vmatprep.subr.bf16.mxu0 0
      %652 = vmatpush2.bf16.msra.mxu0 0
      %653 = vmatprep.subr.bf16.mxu0 0
      %654 = vmatpush2.bf16.msra.mxu0 0
      %655 = vmatprep.subr.bf16.mxu0 0
      %656 = vmatpush2.bf16.msra.mxu0 0
      %657 = vmatprep.subr.bf16.mxu0 0
      %658 = vmatpush2.bf16.msra.mxu0 0
      %659 = vmatprep.subr.bf16.mxu0 0
      %660 = vmatpush2.bf16.msra.mxu0 0
      %661 = vmatprep.subr.bf16.mxu0 0
      %662 = vmatpush2.bf16.msra.mxu0 0
      %663 = vmatprep.subr.bf16.mxu0 0
      %664 = vmatpush2.bf16.msra.mxu0 0
      %665 = vmatprep.mubr.bf16.mxu0 0
      %666 = vmatmul.mubr.bf16.gmra.mxu0 %v625
      %v667 = vpop.f32.mrf.mxu0
      %v668 = vadd.f32 0.0, %v667
      %v669 = vpop.f32.mrf.mxu0
      %v670 = vadd.f32 0.0, %v669
      %v671 = vpop.f32.mrf.mxu0
      %v672 = vpop.f32.mrf.mxu0
      %673 = vdwg.mxu0
      %v674 = vadd.f32 %v602, %v668
      %v675 = vadd.f32 %v603, %v670
      %s676 = scalar_lea.vmem %s5, 10
      %v677 = vld [vmem:[%s676] sm:$0x3]
      %v679 = vlaneseq
      %v680 = vshrl.u32 %v679, 7
      %v681 = vsub.s32 0, %v680
      %v682 = vrot.slane %v677, %v681
      %v683 = vlaneseq
      %v684 = vshrl.u32 %v683, 7
      %v685 = vsub.s32 1, %v684
      %v686 = vrot.slane %v677, %v685
      %v687 = vcombine.low %v682, %v686
      %688 = vrot.lane.b32.xlu0 %v687, 18
      %v689 = vpop.permute.xlu0 %688
      %v690 = vrot.slane %v689, 4
      %vm691 = vcmask 146432
      %v692 = vsel %vm691, %v690, %v689
      %v695 = vmul.f32 %v254, %v692
      %v696 = vmul.f32 %v255, %v690
      %s697 = scalar_lea.vmem %s1, 20
      %v698 = vld [vmem:[%s697] sm:$0xf]
      %v700 = vcombine.high %v695, %v695
      %v702 = vpack.c.bf16 %v695, %v695
      %v703 = vpack.c.bf16 %v700, %v700
      %v704 = vpack.c.bf16 %v696, %v696
      %708 = vrot.lane.b32.xlu0 %v702, 110
      %v709 = vpop.permute.xlu0 %708
      %710 = vrot.lane.b32.xlu0 %v703, 110
      %v711 = vpop.permute.xlu0 %710
      %712 = vrot.lane.b32.xlu0 %v704, 110
      %v713 = vpop.permute.xlu0 %712
      %vm714 = vcmask 900096
      %v715 = vsel %vm714, %v709, %v711
      %v716 = vsel %vm714, %v711, %v713
      %v718 = vsel %vm316, %v698, 0
      %v721 = vsel %vm320, %v715, 0
      %v724 = vsel %vm320, %v716, 0
      %726 = vmatprep.subr.bf16.mxu0 0
      %727 = vmatpush1.bf16.msra.mxu0 0
      %728 = vmatprep.subr.bf16.mxu0 0
      %729 = vmatpush1.bf16.msra.mxu0 0
      %730 = vmatprep.subr.bf16.mxu0 0
      %731 = vmatpush1.bf16.msra.mxu0 0
      %732 = vmatprep.subr.bf16.mxu0 0
      %733 = vmatpush1.bf16.msra.mxu0 0
      %734 = vmatprep.subr.bf16.mxu0 0
      %735 = vmatpush1.bf16.msra.mxu0 0
      %736 = vmatprep.subr.bf16.mxu0 0
      %737 = vmatpush1.bf16.msra.mxu0 0
      %738 = vmatprep.subr.bf16.mxu0 0
      %739 = vmatpush1.bf16.msra.mxu0 0
      %740 = vmatprep.subr.bf16.mxu0 %v724
      %741 = vmatpush1.bf16.msra.mxu0 %v721
      %742 = vmatprep.subr.bf16.mxu0 0
      %743 = vmatpush2.bf16.msra.mxu0 0
      %744 = vmatprep.subr.bf16.mxu0 0
      %745 = vmatpush2.bf16.msra.mxu0 0
      %746 = vmatprep.subr.bf16.mxu0 0
      %747 = vmatpush2.bf16.msra.mxu0 0
      %748 = vmatprep.subr.bf16.mxu0 0
      %749 = vmatpush2.bf16.msra.mxu0 0
      %750 = vmatprep.subr.bf16.mxu0 0
      %751 = vmatpush2.bf16.msra.mxu0 0
      %752 = vmatprep.subr.bf16.mxu0 0
      %753 = vmatpush2.bf16.msra.mxu0 0
      %754 = vmatprep.subr.bf16.mxu0 0
      %755 = vmatpush2.bf16.msra.mxu0 0
      %756 = vmatprep.subr.bf16.mxu0 0
      %757 = vmatpush2.bf16.msra.mxu0 0
      %758 = vmatprep.mubr.bf16.mxu0 0
      %759 = vmatmul.mubr.bf16.gmra.mxu0 %v718
      %v760 = vpop.f32.mrf.mxu0
      %v761 = vadd.f32 0.0, %v760
      %v762 = vpop.f32.mrf.mxu0
      %v763 = vadd.f32 0.0, %v762
      %v764 = vpop.f32.mrf.mxu0
      %v765 = vpop.f32.mrf.mxu0
      %766 = vdwg.mxu0
      %v767 = vadd.f32 %v674, %v761
      %v768 = vadd.f32 %v675, %v763
      %s769 = scalar_lea.vmem %s5, 12
      %v770 = vld [vmem:[%s769] sm:$0x3]
      %v772 = vlaneseq
      %v773 = vshrl.u32 %v772, 7
      %v774 = vsub.s32 0, %v773
      %v775 = vrot.slane %v770, %v774
      %v776 = vlaneseq
      %v777 = vshrl.u32 %v776, 7
      %v778 = vsub.s32 1, %v777
      %v779 = vrot.slane %v770, %v778
      %v780 = vcombine.low %v775, %v779
      %781 = vrot.lane.b32.xlu0 %v780, 32
      %v782 = vpop.permute.xlu0 %781
      %v783 = vrot.slane %v782, 4
      %vm784 = vcmask 261120
      %v785 = vsel %vm784, %v783, %v782
      %v788 = vmul.f32 %v254, %v785
      %v789 = vmul.f32 %v255, %v783
      %s790 = scalar_lea.vmem %s1, 24
      %v791 = vld [vmem:[%s790] sm:$0xf]
      %v793 = vcombine.high %v788, %v788
      %v795 = vpack.c.bf16 %v788, %v788
      %v796 = vpack.c.bf16 %v793, %v793
      %v797 = vpack.c.bf16 %v789, %v789
      %801 = vrot.lane.b32.xlu0 %v795, 96
      %v802 = vpop.permute.xlu0 %801
      %803 = vrot.lane.b32.xlu0 %v796, 96
      %v804 = vpop.permute.xlu0 %803
      %805 = vrot.lane.b32.xlu0 %v797, 96
      %v806 = vpop.permute.xlu0 %805
      %vm807 = vcmask 785408
      %v808 = vsel %vm807, %v802, %v804
      %v809 = vsel %vm807, %v804, %v806
      %v811 = vsel %vm316, %v791, 0
      %v814 = vsel %vm320, %v808, 0
      %v817 = vsel %vm320, %v809, 0
      %819 = vmatprep.subr.bf16.mxu0 0
      %820 = vmatpush1.bf16.msra.mxu0 0
      %821 = vmatprep.subr.bf16.mxu0 0
      %822 = vmatpush1.bf16.msra.mxu0 0
      %823 = vmatprep.subr.bf16.mxu0 0
      %824 = vmatpush1.bf16.msra.mxu0 0
      %825 = vmatprep.subr.bf16.mxu0 0
      %826 = vmatpush1.bf16.msra.mxu0 0
      %827 = vmatprep.subr.bf16.mxu0 0
      %828 = vmatpush1.bf16.msra.mxu0 0
      %829 = vmatprep.subr.bf16.mxu0 0
      %830 = vmatpush1.bf16.msra.mxu0 0
      %831 = vmatprep.subr.bf16.mxu0 0
      %832 = vmatpush1.bf16.msra.mxu0 0
      %833 = vmatprep.subr.bf16.mxu0 %v817
      %834 = vmatpush1.bf16.msra.mxu0 %v814
      %835 = vmatprep.subr.bf16.mxu0 0
      %836 = vmatpush2.bf16.msra.mxu0 0
      %837 = vmatprep.subr.bf16.mxu0 0
      %838 = vmatpush2.bf16.msra.mxu0 0
      %839 = vmatprep.subr.bf16.mxu0 0
      %840 = vmatpush2.bf16.msra.mxu0 0
      %841 = vmatprep.subr.bf16.mxu0 0
      %842 = vmatpush2.bf16.msra.mxu0 0
      %843 = vmatprep.subr.bf16.mxu0 0
      %844 = vmatpush2.bf16.msra.mxu0 0
      %845 = vmatprep.subr.bf16.mxu0 0
      %846 = vmatpush2.bf16.msra.mxu0 0
      %847 = vmatprep.subr.bf16.mxu0 0
      %848 = vmatpush2.bf16.msra.mxu0 0
      %849 = vmatprep.subr.bf16.mxu0 0
      %850 = vmatpush2.bf16.msra.mxu0 0
      %851 = vmatprep.mubr.bf16.mxu0 0
      %852 = vmatmul.mubr.bf16.gmra.mxu0 %v811
      %v853 = vpop.f32.mrf.mxu0
      %v854 = vadd.f32 0.0, %v853
      %v855 = vpop.f32.mrf.mxu0
      %v856 = vadd.f32 0.0, %v855
      %v857 = vpop.f32.mrf.mxu0
      %v858 = vpop.f32.mrf.mxu0
      %859 = vdwg.mxu0
      %v860 = vadd.f32 %v767, %v854
      %v861 = vadd.f32 %v768, %v856
      %s862 = scalar_lea.vmem %s5, 14
      %v863 = vld [vmem:[%s862] sm:$0x3]
      %v865 = vlaneseq
      %v866 = vshrl.u32 %v865, 7
      %v867 = vsub.s32 0, %v866
      %v868 = vrot.slane %v863, %v867
      %v869 = vlaneseq
      %v870 = vshrl.u32 %v869, 7
      %v871 = vsub.s32 1, %v870
      %v872 = vrot.slane %v863, %v871
      %v873 = vcombine.low %v868, %v872
      %874 = vrot.lane.b32.xlu0 %v873, 33
      %v875 = vpop.permute.xlu0 %874
      %v876 = vrot.slane %v875, 4
      %vm877 = vcmask 269312
      %v878 = vsel %vm877, %v876, %v875
      %v881 = vmul.f32 %v254, %v878
      %v882 = vmul.f32 %v255, %v876
      %s883 = scalar_lea.vmem %s1, 28
      %v884 = vld [vmem:[%s883] sm:$0xf]
      %v886 = vcombine.high %v881, %v881
      %v888 = vpack.c.bf16 %v881, %v881
      %v889 = vpack.c.bf16 %v886, %v886
      %v890 = vpack.c.bf16 %v882, %v882
      %894 = vrot.lane.b32.xlu0 %v888, 95
      %v895 = vpop.permute.xlu0 %894
      %896 = vrot.lane.b32.xlu0 %v889, 95
      %v897 = vpop.permute.xlu0 %896
      %898 = vrot.lane.b32.xlu0 %v890, 95
      %v899 = vpop.permute.xlu0 %898
      %vm900 = vcmask 777216
      %v901 = vsel %vm900, %v895, %v897
      %v902 = vsel %vm900, %v897, %v899
      %v904 = vsel %vm316, %v884, 0
      %v907 = vsel %vm320, %v901, 0
      %v910 = vsel %vm320, %v902, 0
      %912 = vmatprep.subr.bf16.mxu0 0
      %913 = vmatpush1.bf16.msra.mxu0 0
      %914 = vmatprep.subr.bf16.mxu0 0
      %915 = vmatpush1.bf16.msra.mxu0 0
      %916 = vmatprep.subr.bf16.mxu0 0
      %917 = vmatpush1.bf16.msra.mxu0 0
      %918 = vmatprep.subr.bf16.mxu0 0
      %919 = vmatpush1.bf16.msra.mxu0 0
      %920 = vmatprep.subr.bf16.mxu0 0
      %921 = vmatpush1.bf16.msra.mxu0 0
      %922 = vmatprep.subr.bf16.mxu0 0
      %923 = vmatpush1.bf16.msra.mxu0 0
      %924 = vmatprep.subr.bf16.mxu0 0
      %925 = vmatpush1.bf16.msra.mxu0 0
      %926 = vmatprep.subr.bf16.mxu0 %v910
      %927 = vmatpush1.bf16.msra.mxu0 %v907
      %928 = vmatprep.subr.bf16.mxu0 0
      %929 = vmatpush2.bf16.msra.mxu0 0
      %930 = vmatprep.subr.bf16.mxu0 0
      %931 = vmatpush2.bf16.msra.mxu0 0
      %932 = vmatprep.subr.bf16.mxu0 0
      %933 = vmatpush2.bf16.msra.mxu0 0
      %934 = vmatprep.subr.bf16.mxu0 0
      %935 = vmatpush2.bf16.msra.mxu0 0
      %936 = vmatprep.subr.bf16.mxu0 0
      %937 = vmatpush2.bf16.msra.mxu0 0
      %938 = vmatprep.subr.bf16.mxu0 0
      %939 = vmatpush2.bf16.msra.mxu0 0
      %940 = vmatprep.subr.bf16.mxu0 0
      %941 = vmatpush2.bf16.msra.mxu0 0
      %942 = vmatprep.subr.bf16.mxu0 0
      %943 = vmatpush2.bf16.msra.mxu0 0
      %944 = vmatprep.mubr.bf16.mxu0 0
      %945 = vmatmul.mubr.bf16.gmra.mxu0 %v904
      %v946 = vpop.f32.mrf.mxu0
      %v947 = vadd.f32 0.0, %v946
      %v948 = vpop.f32.mrf.mxu0
      %v949 = vadd.f32 0.0, %v948
      %v950 = vpop.f32.mrf.mxu0
      %v951 = vpop.f32.mrf.mxu0
      %952 = vdwg.mxu0
      %v953 = vadd.f32 %v860, %v947
      %v954 = vadd.f32 %v861, %v949
      %s955 = scalar_lea.vmem %s5, 16
      %v956 = vld [vmem:[%s955] sm:$0x3]
      %v958 = vlaneseq
      %v959 = vshrl.u32 %v958, 7
      %v960 = vsub.s32 0, %v959
      %v961 = vrot.slane %v956, %v960
      %v962 = vlaneseq
      %v963 = vshrl.u32 %v962, 7
      %v964 = vsub.s32 1, %v963
      %v965 = vrot.slane %v956, %v964
      %v966 = vcombine.low %v961, %v965
      %967 = vrot.lane.b32.xlu0 %v966, 34
      %v968 = vpop.permute.xlu0 %967
      %v969 = vrot.slane %v968, 4
      %vm970 = vcmask 277504
      %v971 = vsel %vm970, %v969, %v968
      %v974 = vmul.f32 %v254, %v971
      %v975 = vmul.f32 %v255, %v969
      %s976 = scalar_lea.vmem %s1, 32
      %v977 = vld [vmem:[%s976] sm:$0xf]
      %v979 = vcombine.high %v974, %v974
      %v981 = vpack.c.bf16 %v974, %v974
      %v982 = vpack.c.bf16 %v979, %v979
      %v983 = vpack.c.bf16 %v975, %v975
      %987 = vrot.lane.b32.xlu0 %v981, 94
      %v988 = vpop.permute.xlu0 %987
      %989 = vrot.lane.b32.xlu0 %v982, 94
      %v990 = vpop.permute.xlu0 %989
      %991 = vrot.lane.b32.xlu0 %v983, 94
      %v992 = vpop.permute.xlu0 %991
      %vm993 = vcmask 769024
      %v994 = vsel %vm993, %v988, %v990
      %v995 = vsel %vm993, %v990, %v992
      %v997 = vsel %vm316, %v977, 0
      %v1000 = vsel %vm320, %v994, 0
      %v1003 = vsel %vm320, %v995, 0
      %1005 = vmatprep.subr.bf16.mxu0 0
      %1006 = vmatpush1.bf16.msra.mxu0 0
      %1007 = vmatprep.subr.bf16.mxu0 0
      %1008 = vmatpush1.bf16.msra.mxu0 0
      %1009 = vmatprep.subr.bf16.mxu0 0
      %1010 = vmatpush1.bf16.msra.mxu0 0
      %1011 = vmatprep.subr.bf16.mxu0 0
      %1012 = vmatpush1.bf16.msra.mxu0 0
      %1013 = vmatprep.subr.bf16.mxu0 0
      %1014 = vmatpush1.bf16.msra.mxu0 0
      %1015 = vmatprep.subr.bf16.mxu0 0
      %1016 = vmatpush1.bf16.msra.mxu0 0
      %1017 = vmatprep.subr.bf16.mxu0 0
      %1018 = vmatpush1.bf16.msra.mxu0 0
      %1019 = vmatprep.subr.bf16.mxu0 %v1003
      %1020 = vmatpush1.bf16.msra.mxu0 %v1000
      %1021 = vmatprep.subr.bf16.mxu0 0
      %1022 = vmatpush2.bf16.msra.mxu0 0
      %1023 = vmatprep.subr.bf16.mxu0 0
      %1024 = vmatpush2.bf16.msra.mxu0 0
      %1025 = vmatprep.subr.bf16.mxu0 0
      %1026 = vmatpush2.bf16.msra.mxu0 0
      %1027 = vmatprep.subr.bf16.mxu0 0
      %1028 = vmatpush2.bf16.msra.mxu0 0
      %1029 = vmatprep.subr.bf16.mxu0 0
      %1030 = vmatpush2.bf16.msra.mxu0 0
      %1031 = vmatprep.subr.bf16.mxu0 0
      %1032 = vmatpush2.bf16.msra.mxu0 0
      %1033 = vmatprep.subr.bf16.mxu0 0
      %1034 = vmatpush2.bf16.msra.mxu0 0
      %1035 = vmatprep.subr.bf16.mxu0 0
      %1036 = vmatpush2.bf16.msra.mxu0 0
      %1037 = vmatprep.mubr.bf16.mxu0 0
      %1038 = vmatmul.mubr.bf16.gmra.mxu0 %v997
      %v1039 = vpop.f32.mrf.mxu0
      %v1040 = vadd.f32 0.0, %v1039
      %v1041 = vpop.f32.mrf.mxu0
      %v1042 = vadd.f32 0.0, %v1041
      %v1043 = vpop.f32.mrf.mxu0
      %v1044 = vpop.f32.mrf.mxu0
      %1045 = vdwg.mxu0
      %v1046 = vadd.f32 %v953, %v1040
      %v1047 = vadd.f32 %v954, %v1042
      %v1048 = vld [vmem:[%s2] sm:$0xff]
      %1050 = vset.pattern.permute.xlu0 0
      %1051 = vperm.xlu0 %1050, %v1048
      %v1052 = vpop.permute.xlu0 %1051
      %v1054 = vadd.f32 %v1046, %v1052
      %v1055 = vadd.f32 %v1047, %v1052
      %v1056 = vmax.f32 %v1054, 0.0
      %v1057 = vmax.f32 %v1055, 0.0
      %1060 = vrot.lane.b32.xlu0 %v1056, 17
      %v1061 = vpop.permute.xlu0 %1060
      %1062 = vrot.lane.b32.xlu0 %v1057, 17
      %v1063 = vpop.permute.xlu0 %1062
      %vm1064 = vcmask 138240
      %v1065 = vsel %vm1064, %v1061, %v1063
      %v1069 = vsel %vm1064, 0.0, %v1061
      %v1070 = vsel %vm1064, %v1063, 0.0
      %v1073 = vmul.f32 %v1069, %v261
      %v1074 = vmul.f32 %v1065, %v265
      %v1075 = vld [vmem:[%s3] sm:$0xf]
      %v1076 = vld [vmem:[%s3 + $0x4] sm:$0xf]
      %v1077 = vpack.c.bf16 %v1073, %v1073
      %v1078 = vpack.c.bf16 %v1074, %v1074
      %1079 = vrot.lane.b32.xlu0 %v281, 1
      %v1080 = vpop.permute.xlu0 %1079
      %1081 = vrot.lane.b32.xlu0 %v285, 1
      %v1082 = vpop.permute.xlu0 %1081
      %v1083 = vsel %vm290, %v1080, %v1082
      %v1087 = vmul.f32 %v1069, %v1080
      %v1088 = vmul.f32 %v1065, %v1083
      %v1089 = vmul.f32 %v1070, %v1082
      %s1090 = scalar_lea.vmem %s3, 8
      %v1091 = vld [vmem:[%s1090] sm:$0xf]
      %v1092 = vld [vmem:[%s1090 + $0x4] sm:$0xf]
      %v1093 = vpack.c.bf16 %v1087, %v1087
      %v1094 = vpack.c.bf16 %v1088, %v1088
      %v1095 = vpack.c.bf16 %v1089, %v1089
      %v1098 = vunpack.c.l.b16 %v1091
      %v1099 = vunpack.c.l.b16 %v1092
      %v1100 = vpack.c.b16 %v1099, %v1098
      %1104 = vrot.lane.b32.xlu0 %v1093, 127
      %v1105 = vpop.permute.xlu0 %1104
      %1106 = vrot.lane.b32.xlu0 %v1094, 127
      %v1107 = vpop.permute.xlu0 %1106
      %1108 = vrot.lane.b32.xlu0 %v1095, 127
      %v1109 = vpop.permute.xlu0 %1108
      %v1110 = vsel %vm313, %v1105, %v1107
      %v1111 = vsel %vm313, %v1107, %v1109
      %vm1112 = vcmask 64512
      %v1114 = vsel %vm1112, %v1100, 0
      %vm1116 = vcmask 1043456
      %v1118 = vsel %vm1116, %v1110, 0
      %v1121 = vsel %vm1116, %v1111, 0
      %1123 = vmatprep.subr.bf16.mxu0 0
      %1124 = vmatpush1.bf16.msra.mxu0 0
      %1125 = vmatprep.subr.bf16.mxu0 0
      %1126 = vmatpush1.bf16.msra.mxu0 0
      %1127 = vmatprep.subr.bf16.mxu0 0
      %1128 = vmatpush1.bf16.msra.mxu0 0
      %1129 = vmatprep.subr.bf16.mxu0 0
      %1130 = vmatpush1.bf16.msra.mxu0 0
      %1131 = vmatprep.subr.bf16.mxu0 0
      %1132 = vmatpush1.bf16.msra.mxu0 0
      %1133 = vmatprep.subr.bf16.mxu0 0
      %1134 = vmatpush1.bf16.msra.mxu0 0
      %1135 = vmatprep.subr.bf16.mxu0 0
      %1136 = vmatpush1.bf16.msra.mxu0 0
      %1137 = vmatprep.subr.bf16.mxu0 %v1121
      %1138 = vmatpush1.bf16.msra.mxu0 %v1118
      %1139 = vmatprep.subr.bf16.mxu0 0
      %1140 = vmatpush2.bf16.msra.mxu0 0
      %1141 = vmatprep.subr.bf16.mxu0 0
      %1142 = vmatpush2.bf16.msra.mxu0 0
      %1143 = vmatprep.subr.bf16.mxu0 0
      %1144 = vmatpush2.bf16.msra.mxu0 0
      %1145 = vmatprep.subr.bf16.mxu0 0
      %1146 = vmatpush2.bf16.msra.mxu0 0
      %1147 = vmatprep.subr.bf16.mxu0 0
      %1148 = vmatpush2.bf16.msra.mxu0 0
      %1149 = vmatprep.subr.bf16.mxu0 0
      %1150 = vmatpush2.bf16.msra.mxu0 0
      %1151 = vmatprep.subr.bf16.mxu0 0
      %1152 = vmatpush2.bf16.msra.mxu0 0
      %1153 = vmatprep.subr.bf16.mxu0 0
      %1154 = vmatpush2.bf16.msra.mxu0 0
      %1155 = vmatprep.mubr.bf16.mxu0 0
      %1156 = vmatmul.mubr.bf16.gmra.mxu0 %v1114
      %v1157 = vpop.f32.mrf.mxu0
      %v1158 = vadd.f32 0.0, %v1157
      %v1159 = vpop.f32.mrf.mxu0
      %v1160 = vadd.f32 0.0, %v1159
      %v1161 = vpop.f32.mrf.mxu0
      %v1162 = vadd.f32 0.0, %v1161
      %v1163 = vpop.f32.mrf.mxu0
      %v1164 = vadd.f32 0.0, %v1163
      %1165 = vdwg.mxu0
      %v1168 = vunpack.c.l.b16 %v1075
      %v1169 = vunpack.c.l.b16 %v1076
      %v1170 = vpack.c.b16 %v1169, %v1168
      %v1172 = vsel %vm1112, %v1170, 0
      %v1175 = vsel %vm1116, %v1077, 0
      %v1178 = vsel %vm1116, %v1078, 0
      %1180 = vmatprep.subr.bf16.mxu0 0
      %1181 = vmatpush1.bf16.msra.mxu0 0
      %1182 = vmatprep.subr.bf16.mxu0 0
      %1183 = vmatpush1.bf16.msra.mxu0 0
      %1184 = vmatprep.subr.bf16.mxu0 0
      %1185 = vmatpush1.bf16.msra.mxu0 0
      %1186 = vmatprep.subr.bf16.mxu0 0
      %1187 = vmatpush1.bf16.msra.mxu0 0
      %1188 = vmatprep.subr.bf16.mxu0 0
      %1189 = vmatpush1.bf16.msra.mxu0 0
      %1190 = vmatprep.subr.bf16.mxu0 0
      %1191 = vmatpush1.bf16.msra.mxu0 0
      %1192 = vmatprep.subr.bf16.mxu0 0
      %1193 = vmatpush1.bf16.msra.mxu0 0
      %1194 = vmatprep.subr.bf16.mxu0 %v1178
      %1195 = vmatpush1.bf16.msra.mxu0 %v1175
      %1196 = vmatprep.subr.bf16.mxu0 0
      %1197 = vmatpush2.bf16.msra.mxu0 0
      %1198 = vmatprep.subr.bf16.mxu0 0
      %1199 = vmatpush2.bf16.msra.mxu0 0
      %1200 = vmatprep.subr.bf16.mxu0 0
      %1201 = vmatpush2.bf16.msra.mxu0 0
      %1202 = vmatprep.subr.bf16.mxu0 0
      %1203 = vmatpush2.bf16.msra.mxu0 0
      %1204 = vmatprep.subr.bf16.mxu0 0
      %1205 = vmatpush2.bf16.msra.mxu0 0
      %1206 = vmatprep.subr.bf16.mxu0 0
      %1207 = vmatpush2.bf16.msra.mxu0 0
      %1208 = vmatprep.subr.bf16.mxu0 0
      %1209 = vmatpush2.bf16.msra.mxu0 0
      %1210 = vmatprep.subr.bf16.mxu0 0
      %1211 = vmatpush2.bf16.msra.mxu0 0
      %1212 = vmatprep.mubr.bf16.mxu0 0
      %1213 = vmatmul.mubr.bf16.gmra.mxu0 %v1172
      %v1214 = vpop.f32.mrf.mxu0
      %v1215 = vadd.f32 %v1158, %v1214
      %v1216 = vpop.f32.mrf.mxu0
      %v1217 = vadd.f32 %v1160, %v1216
      %v1218 = vpop.f32.mrf.mxu0
      %v1219 = vadd.f32 %v1162, %v1218
      %v1220 = vpop.f32.mrf.mxu0
      %v1221 = vadd.f32 %v1164, %v1220
      %1222 = vdwg.mxu0
      %1223 = vrot.lane.b32.xlu0 %v424, 2
      %v1224 = vpop.permute.xlu0 %1223
      %1225 = vrot.lane.b32.xlu0 %v428, 2
      %v1226 = vpop.permute.xlu0 %1225
      %v1227 = vsel %vm433, %v1224, %v1226
      %v1231 = vmul.f32 %v1069, %v1224
      %v1232 = vmul.f32 %v1065, %v1227
      %v1233 = vmul.f32 %v1070, %v1226
      %s1234 = scalar_lea.vmem %s3, 16
      %v1235 = vld [vmem:[%s1234] sm:$0xf]
      %v1236 = vld [vmem:[%s1234 + $0x4] sm:$0xf]
      %v1237 = vpack.c.bf16 %v1231, %v1231
      %v1238 = vpack.c.bf16 %v1232, %v1232
      %v1239 = vpack.c.bf16 %v1233, %v1233
      %v1242 = vunpack.c.l.b16 %v1235
      %v1243 = vunpack.c.l.b16 %v1236
      %v1244 = vpack.c.b16 %v1243, %v1242
      %1248 = vrot.lane.b32.xlu0 %v1237, 126
      %v1249 = vpop.permute.xlu0 %1248
      %1250 = vrot.lane.b32.xlu0 %v1238, 126
      %v1251 = vpop.permute.xlu0 %1250
      %1252 = vrot.lane.b32.xlu0 %v1239, 126
      %v1253 = vpop.permute.xlu0 %1252
      %v1254 = vsel %vm456, %v1249, %v1251
      %v1255 = vsel %vm456, %v1251, %v1253
      %v1257 = vsel %vm1112, %v1244, 0
      %v1260 = vsel %vm1116, %v1254, 0
      %v1263 = vsel %vm1116, %v1255, 0
      %1265 = vmatprep.subr.bf16.mxu0 0
      %1266 = vmatpush1.bf16.msra.mxu0 0
      %1267 = vmatprep.subr.bf16.mxu0 0
      %1268 = vmatpush1.bf16.msra.mxu0 0
      %1269 = vmatprep.subr.bf16.mxu0 0
      %1270 = vmatpush1.bf16.msra.mxu0 0
      %1271 = vmatprep.subr.bf16.mxu0 0
      %1272 = vmatpush1.bf16.msra.mxu0 0
      %1273 = vmatprep.subr.bf16.mxu0 0
      %1274 = vmatpush1.bf16.msra.mxu0 0
      %1275 = vmatprep.subr.bf16.mxu0 0
      %1276 = vmatpush1.bf16.msra.mxu0 0
      %1277 = vmatprep.subr.bf16.mxu0 0
      %1278 = vmatpush1.bf16.msra.mxu0 0
      %1279 = vmatprep.subr.bf16.mxu0 %v1263
      %1280 = vmatpush1.bf16.msra.mxu0 %v1260
      %1281 = vmatprep.subr.bf16.mxu0 0
      %1282 = vmatpush2.bf16.msra.mxu0 0
      %1283 = vmatprep.subr.bf16.mxu0 0
      %1284 = vmatpush2.bf16.msra.mxu0 0
      %1285 = vmatprep.subr.bf16.mxu0 0
      %1286 = vmatpush2.bf16.msra.mxu0 0
      %1287 = vmatprep.subr.bf16.mxu0 0
      %1288 = vmatpush2.bf16.msra.mxu0 0
      %1289 = vmatprep.subr.bf16.mxu0 0
      %1290 = vmatpush2.bf16.msra.mxu0 0
      %1291 = vmatprep.subr.bf16.mxu0 0
      %1292 = vmatpush2.bf16.msra.mxu0 0
      %1293 = vmatprep.subr.bf16.mxu0 0
      %1294 = vmatpush2.bf16.msra.mxu0 0
      %1295 = vmatprep.subr.bf16.mxu0 0
      %1296 = vmatpush2.bf16.msra.mxu0 0
      %1297 = vmatprep.mubr.bf16.mxu0 0
      %1298 = vmatmul.mubr.bf16.gmra.mxu0 %v1257
      %v1299 = vpop.f32.mrf.mxu0
      %v1300 = vadd.f32 0.0, %v1299
      %v1301 = vpop.f32.mrf.mxu0
      %v1302 = vadd.f32 0.0, %v1301
      %v1303 = vpop.f32.mrf.mxu0
      %v1304 = vadd.f32 0.0, %v1303
      %v1305 = vpop.f32.mrf.mxu0
      %v1306 = vadd.f32 0.0, %v1305
      %1307 = vdwg.mxu0
      %v1308 = vadd.f32 %v1215, %v1300
      %v1309 = vadd.f32 %v1217, %v1302
      %v1310 = vadd.f32 %v1219, %v1304
      %v1311 = vadd.f32 %v1221, %v1306
      %1312 = vrot.lane.b32.xlu0 %v517, 16
      %v1313 = vpop.permute.xlu0 %1312
      %1314 = vrot.lane.b32.xlu0 %v521, 16
      %v1315 = vpop.permute.xlu0 %1314
      %v1316 = vsel %vm526, %v1313, %v1315
      %v1320 = vmul.f32 %v1069, %v1313
      %v1321 = vmul.f32 %v1065, %v1316
      %v1322 = vmul.f32 %v1070, %v1315
      %s1323 = scalar_lea.vmem %s3, 24
      %v1324 = vld [vmem:[%s1323] sm:$0xf]
      %v1325 = vld [vmem:[%s1323 + $0x4] sm:$0xf]
      %v1326 = vpack.c.bf16 %v1320, %v1320
      %v1327 = vpack.c.bf16 %v1321, %v1321
      %v1328 = vpack.c.bf16 %v1322, %v1322
      %v1331 = vunpack.c.l.b16 %v1324
      %v1332 = vunpack.c.l.b16 %v1325
      %v1333 = vpack.c.b16 %v1332, %v1331
      %1337 = vrot.lane.b32.xlu0 %v1326, 112
      %v1338 = vpop.permute.xlu0 %1337
      %1339 = vrot.lane.b32.xlu0 %v1327, 112
      %v1340 = vpop.permute.xlu0 %1339
      %1341 = vrot.lane.b32.xlu0 %v1328, 112
      %v1342 = vpop.permute.xlu0 %1341
      %v1343 = vsel %vm549, %v1338, %v1340
      %v1344 = vsel %vm549, %v1340, %v1342
      %v1346 = vsel %vm1112, %v1333, 0
      %v1349 = vsel %vm1116, %v1343, 0
      %v1352 = vsel %vm1116, %v1344, 0
      %1354 = vmatprep.subr.bf16.mxu0 0
      %1355 = vmatpush1.bf16.msra.mxu0 0
      %1356 = vmatprep.subr.bf16.mxu0 0
      %1357 = vmatpush1.bf16.msra.mxu0 0
      %1358 = vmatprep.subr.bf16.mxu0 0
      %1359 = vmatpush1.bf16.msra.mxu0 0
      %1360 = vmatprep.subr.bf16.mxu0 0
      %1361 = vmatpush1.bf16.msra.mxu0 0
      %1362 = vmatprep.subr.bf16.mxu0 0
      %1363 = vmatpush1.bf16.msra.mxu0 0
      %1364 = vmatprep.subr.bf16.mxu0 0
      %1365 = vmatpush1.bf16.msra.mxu0 0
      %1366 = vmatprep.subr.bf16.mxu0 0
      %1367 = vmatpush1.bf16.msra.mxu0 0
      %1368 = vmatprep.subr.bf16.mxu0 %v1352
      %1369 = vmatpush1.bf16.msra.mxu0 %v1349
      %1370 = vmatprep.subr.bf16.mxu0 0
      %1371 = vmatpush2.bf16.msra.mxu0 0
      %1372 = vmatprep.subr.bf16.mxu0 0
      %1373 = vmatpush2.bf16.msra.mxu0 0
      %1374 = vmatprep.subr.bf16.mxu0 0
      %1375 = vmatpush2.bf16.msra.mxu0 0
      %1376 = vmatprep.subr.bf16.mxu0 0
      %1377 = vmatpush2.bf16.msra.mxu0 0
      %1378 = vmatprep.subr.bf16.mxu0 0
      %1379 = vmatpush2.bf16.msra.mxu0 0
      %1380 = vmatprep.subr.bf16.mxu0 0
      %1381 = vmatpush2.bf16.msra.mxu0 0
      %1382 = vmatprep.subr.bf16.mxu0 0
      %1383 = vmatpush2.bf16.msra.mxu0 0
      %1384 = vmatprep.subr.bf16.mxu0 0
      %1385 = vmatpush2.bf16.msra.mxu0 0
      %1386 = vmatprep.mubr.bf16.mxu0 0
      %1387 = vmatmul.mubr.bf16.gmra.mxu0 %v1346
      %v1388 = vpop.f32.mrf.mxu0
      %v1389 = vadd.f32 0.0, %v1388
      %v1390 = vpop.f32.mrf.mxu0
      %v1391 = vadd.f32 0.0, %v1390
      %v1392 = vpop.f32.mrf.mxu0
      %v1393 = vadd.f32 0.0, %v1392
      %v1394 = vpop.f32.mrf.mxu0
      %v1395 = vadd.f32 0.0, %v1394
      %1396 = vdwg.mxu0
      %v1397 = vadd.f32 %v1308, %v1389
      %v1398 = vadd.f32 %v1309, %v1391
      %v1399 = vadd.f32 %v1310, %v1393
      %v1400 = vadd.f32 %v1311, %v1395
      %s1401 = scalar_lea.vmem %s3, 32
      %v1402 = vld [vmem:[%s1401] sm:$0xf]
      %v1403 = vld [vmem:[%s1401 + $0x4] sm:$0xf]
      %v1404 = vpack.c.bf16 %v1069, %v1069
      %v1405 = vpack.c.bf16 %v1065, %v1065
      %v1406 = vpack.c.bf16 %v1070, %v1070
      %v1409 = vunpack.c.l.b16 %v1402
      %v1410 = vunpack.c.l.b16 %v1403
      %v1411 = vpack.c.b16 %v1410, %v1409
      %1415 = vrot.lane.b32.xlu0 %v1404, 111
      %v1416 = vpop.permute.xlu0 %1415
      %1417 = vrot.lane.b32.xlu0 %v1405, 111
      %v1418 = vpop.permute.xlu0 %1417
      %1419 = vrot.lane.b32.xlu0 %v1406, 111
      %v1420 = vpop.permute.xlu0 %1419
      %v1421 = vsel %vm621, %v1416, %v1418
      %v1422 = vsel %vm621, %v1418, %v1420
      %v1424 = vsel %vm1112, %v1411, 0
      %v1427 = vsel %vm1116, %v1421, 0
      %v1430 = vsel %vm1116, %v1422, 0
      %1432 = vmatprep.subr.bf16.mxu0 0
      %1433 = vmatpush1.bf16.msra.mxu0 0
      %1434 = vmatprep.subr.bf16.mxu0 0
      %1435 = vmatpush1.bf16.msra.mxu0 0
      %1436 = vmatprep.subr.bf16.mxu0 0
      %1437 = vmatpush1.bf16.msra.mxu0 0
      %1438 = vmatprep.subr.bf16.mxu0 0
      %1439 = vmatpush1.bf16.msra.mxu0 0
      %1440 = vmatprep.subr.bf16.mxu0 0
      %1441 = vmatpush1.bf16.msra.mxu0 0
      %1442 = vmatprep.subr.bf16.mxu0 0
      %1443 = vmatpush1.bf16.msra.mxu0 0
      %1444 = vmatprep.subr.bf16.mxu0 0
      %1445 = vmatpush1.bf16.msra.mxu0 0
      %1446 = vmatprep.subr.bf16.mxu0 %v1430
      %1447 = vmatpush1.bf16.msra.mxu0 %v1427
      %1448 = vmatprep.subr.bf16.mxu0 0
      %1449 = vmatpush2.bf16.msra.mxu0 0
      %1450 = vmatprep.subr.bf16.mxu0 0
      %1451 = vmatpush2.bf16.msra.mxu0 0
      %1452 = vmatprep.subr.bf16.mxu0 0
      %1453 = vmatpush2.bf16.msra.mxu0 0
      %1454 = vmatprep.subr.bf16.mxu0 0
      %1455 = vmatpush2.bf16.msra.mxu0 0
      %1456 = vmatprep.subr.bf16.mxu0 0
      %1457 = vmatpush2.bf16.msra.mxu0 0
      %1458 = vmatprep.subr.bf16.mxu0 0
      %1459 = vmatpush2.bf16.msra.mxu0 0
      %1460 = vmatprep.subr.bf16.mxu0 0
      %1461 = vmatpush2.bf16.msra.mxu0 0
      %1462 = vmatprep.subr.bf16.mxu0 0
      %1463 = vmatpush2.bf16.msra.mxu0 0
      %1464 = vmatprep.mubr.bf16.mxu0 0
      %1465 = vmatmul.mubr.bf16.gmra.mxu0 %v1424
      %v1466 = vpop.f32.mrf.mxu0
      %v1467 = vadd.f32 0.0, %v1466
      %v1468 = vpop.f32.mrf.mxu0
      %v1469 = vadd.f32 0.0, %v1468
      %v1470 = vpop.f32.mrf.mxu0
      %v1471 = vadd.f32 0.0, %v1470
      %v1472 = vpop.f32.mrf.mxu0
      %v1473 = vadd.f32 0.0, %v1472
      %1474 = vdwg.mxu0
      %v1475 = vadd.f32 %v1397, %v1467
      %v1476 = vadd.f32 %v1398, %v1469
      %v1477 = vadd.f32 %v1399, %v1471
      %v1478 = vadd.f32 %v1400, %v1473
      %1479 = vrot.lane.b32.xlu0 %v682, 18
      %v1480 = vpop.permute.xlu0 %1479
      %1481 = vrot.lane.b32.xlu0 %v686, 18
      %v1482 = vpop.permute.xlu0 %1481
      %v1483 = vsel %vm691, %v1480, %v1482
      %v1487 = vmul.f32 %v1069, %v1480
      %v1488 = vmul.f32 %v1065, %v1483
      %v1489 = vmul.f32 %v1070, %v1482
      %s1490 = scalar_lea.vmem %s3, 40
      %v1491 = vld [vmem:[%s1490] sm:$0xf]
      %v1492 = vld [vmem:[%s1490 + $0x4] sm:$0xf]
      %v1493 = vpack.c.bf16 %v1487, %v1487
      %v1494 = vpack.c.bf16 %v1488, %v1488
      %v1495 = vpack.c.bf16 %v1489, %v1489
      %v1498 = vunpack.c.l.b16 %v1491
      %v1499 = vunpack.c.l.b16 %v1492
      %v1500 = vpack.c.b16 %v1499, %v1498
      %1504 = vrot.lane.b32.xlu0 %v1493, 110
      %v1505 = vpop.permute.xlu0 %1504
      %1506 = vrot.lane.b32.xlu0 %v1494, 110
      %v1507 = vpop.permute.xlu0 %1506
      %1508 = vrot.lane.b32.xlu0 %v1495, 110
      %v1509 = vpop.permute.xlu0 %1508
      %v1510 = vsel %vm714, %v1505, %v1507
      %v1511 = vsel %vm714, %v1507, %v1509
      %v1513 = vsel %vm1112, %v1500, 0
      %v1516 = vsel %vm1116, %v1510, 0
      %v1519 = vsel %vm1116, %v1511, 0
      %1521 = vmatprep.subr.bf16.mxu0 0
      %1522 = vmatpush1.bf16.msra.mxu0 0
      %1523 = vmatprep.subr.bf16.mxu0 0
      %1524 = vmatpush1.bf16.msra.mxu0 0
      %1525 = vmatprep.subr.bf16.mxu0 0
      %1526 = vmatpush1.bf16.msra.mxu0 0
      %1527 = vmatprep.subr.bf16.mxu0 0
      %1528 = vmatpush1.bf16.msra.mxu0 0
      %1529 = vmatprep.subr.bf16.mxu0 0
      %1530 = vmatpush1.bf16.msra.mxu0 0
      %1531 = vmatprep.subr.bf16.mxu0 0
      %1532 = vmatpush1.bf16.msra.mxu0 0
      %1533 = vmatprep.subr.bf16.mxu0 0
      %1534 = vmatpush1.bf16.msra.mxu0 0
      %1535 = vmatprep.subr.bf16.mxu0 %v1519
      %1536 = vmatpush1.bf16.msra.mxu0 %v1516
      %1537 = vmatprep.subr.bf16.mxu0 0
      %1538 = vmatpush2.bf16.msra.mxu0 0
      %1539 = vmatprep.subr.bf16.mxu0 0
      %1540 = vmatpush2.bf16.msra.mxu0 0
      %1541 = vmatprep.subr.bf16.mxu0 0
      %1542 = vmatpush2.bf16.msra.mxu0 0
      %1543 = vmatprep.subr.bf16.mxu0 0
      %1544 = vmatpush2.bf16.msra.mxu0 0
      %1545 = vmatprep.subr.bf16.mxu0 0
      %1546 = vmatpush2.bf16.msra.mxu0 0
      %1547 = vmatprep.subr.bf16.mxu0 0
      %1548 = vmatpush2.bf16.msra.mxu0 0
      %1549 = vmatprep.subr.bf16.mxu0 0
      %1550 = vmatpush2.bf16.msra.mxu0 0
      %1551 = vmatprep.subr.bf16.mxu0 0
      %1552 = vmatpush2.bf16.msra.mxu0 0
      %1553 = vmatprep.mubr.bf16.mxu0 0
      %1554 = vmatmul.mubr.bf16.gmra.mxu0 %v1513
      %v1555 = vpop.f32.mrf.mxu0
      %v1556 = vadd.f32 0.0, %v1555
      %v1557 = vpop.f32.mrf.mxu0
      %v1558 = vadd.f32 0.0, %v1557
      %v1559 = vpop.f32.mrf.mxu0
      %v1560 = vadd.f32 0.0, %v1559
      %v1561 = vpop.f32.mrf.mxu0
      %v1562 = vadd.f32 0.0, %v1561
      %1563 = vdwg.mxu0
      %v1564 = vadd.f32 %v1475, %v1556
      %v1565 = vadd.f32 %v1476, %v1558
      %v1566 = vadd.f32 %v1477, %v1560
      %v1567 = vadd.f32 %v1478, %v1562
      %1568 = vrot.lane.b32.xlu0 %v775, 32
      %v1569 = vpop.permute.xlu0 %1568
      %1570 = vrot.lane.b32.xlu0 %v779, 32
      %v1571 = vpop.permute.xlu0 %1570
      %v1572 = vsel %vm784, %v1569, %v1571
      %v1576 = vmul.f32 %v1069, %v1569
      %v1577 = vmul.f32 %v1065, %v1572
      %v1578 = vmul.f32 %v1070, %v1571
      %s1579 = scalar_lea.vmem %s3, 48
      %v1580 = vld [vmem:[%s1579] sm:$0xf]
      %v1581 = vld [vmem:[%s1579 + $0x4] sm:$0xf]
      %v1582 = vpack.c.bf16 %v1576, %v1576
      %v1583 = vpack.c.bf16 %v1577, %v1577
      %v1584 = vpack.c.bf16 %v1578, %v1578
      %v1587 = vunpack.c.l.b16 %v1580
      %v1588 = vunpack.c.l.b16 %v1581
      %v1589 = vpack.c.b16 %v1588, %v1587
      %1593 = vrot.lane.b32.xlu0 %v1582, 96
      %v1594 = vpop.permute.xlu0 %1593
      %1595 = vrot.lane.b32.xlu0 %v1583, 96
      %v1596 = vpop.permute.xlu0 %1595
      %1597 = vrot.lane.b32.xlu0 %v1584, 96
      %v1598 = vpop.permute.xlu0 %1597
      %v1599 = vsel %vm807, %v1594, %v1596
      %v1600 = vsel %vm807, %v1596, %v1598
      %v1602 = vsel %vm1112, %v1589, 0
      %v1605 = vsel %vm1116, %v1599, 0
      %v1608 = vsel %vm1116, %v1600, 0
      %1610 = vmatprep.subr.bf16.mxu0 0
      %1611 = vmatpush1.bf16.msra.mxu0 0
      %1612 = vmatprep.subr.bf16.mxu0 0
      %1613 = vmatpush1.bf16.msra.mxu0 0
      %1614 = vmatprep.subr.bf16.mxu0 0
      %1615 = vmatpush1.bf16.msra.mxu0 0
      %1616 = vmatprep.subr.bf16.mxu0 0
      %1617 = vmatpush1.bf16.msra.mxu0 0
      %1618 = vmatprep.subr.bf16.mxu0 0
      %1619 = vmatpush1.bf16.msra.mxu0 0
      %1620 = vmatprep.subr.bf16.mxu0 0
      %1621 = vmatpush1.bf16.msra.mxu0 0
      %1622 = vmatprep.subr.bf16.mxu0 0
      %1623 = vmatpush1.bf16.msra.mxu0 0
      %1624 = vmatprep.subr.bf16.mxu0 %v1608
      %1625 = vmatpush1.bf16.msra.mxu0 %v1605
      %1626 = vmatprep.subr.bf16.mxu0 0
      %1627 = vmatpush2.bf16.msra.mxu0 0
      %1628 = vmatprep.subr.bf16.mxu0 0
      %1629 = vmatpush2.bf16.msra.mxu0 0
      %1630 = vmatprep.subr.bf16.mxu0 0
      %1631 = vmatpush2.bf16.msra.mxu0 0
      %1632 = vmatprep.subr.bf16.mxu0 0
      %1633 = vmatpush2.bf16.msra.mxu0 0
      %1634 = vmatprep.subr.bf16.mxu0 0
      %1635 = vmatpush2.bf16.msra.mxu0 0
      %1636 = vmatprep.subr.bf16.mxu0 0
      %1637 = vmatpush2.bf16.msra.mxu0 0
      %1638 = vmatprep.subr.bf16.mxu0 0
      %1639 = vmatpush2.bf16.msra.mxu0 0
      %1640 = vmatprep.subr.bf16.mxu0 0
      %1641 = vmatpush2.bf16.msra.mxu0 0
      %1642 = vmatprep.mubr.bf16.mxu0 0
      %1643 = vmatmul.mubr.bf16.gmra.mxu0 %v1602
      %v1644 = vpop.f32.mrf.mxu0
      %v1645 = vadd.f32 0.0, %v1644
      %v1646 = vpop.f32.mrf.mxu0
      %v1647 = vadd.f32 0.0, %v1646
      %v1648 = vpop.f32.mrf.mxu0
      %v1649 = vadd.f32 0.0, %v1648
      %v1650 = vpop.f32.mrf.mxu0
      %v1651 = vadd.f32 0.0, %v1650
      %1652 = vdwg.mxu0
      %v1653 = vadd.f32 %v1564, %v1645
      %v1654 = vadd.f32 %v1565, %v1647
      %v1655 = vadd.f32 %v1566, %v1649
      %v1656 = vadd.f32 %v1567, %v1651
      %1657 = vrot.lane.b32.xlu0 %v868, 33
      %v1658 = vpop.permute.xlu0 %1657
      %1659 = vrot.lane.b32.xlu0 %v872, 33
      %v1660 = vpop.permute.xlu0 %1659
      %v1661 = vsel %vm877, %v1658, %v1660
      %v1665 = vmul.f32 %v1069, %v1658
      %v1666 = vmul.f32 %v1065, %v1661
      %v1667 = vmul.f32 %v1070, %v1660
      %s1668 = scalar_lea.vmem %s3, 56
      %v1669 = vld [vmem:[%s1668] sm:$0xf]
      %v1670 = vld [vmem:[%s1668 + $0x4] sm:$0xf]
      %v1671 = vpack.c.bf16 %v1665, %v1665
      %v1672 = vpack.c.bf16 %v1666, %v1666
      %v1673 = vpack.c.bf16 %v1667, %v1667
      %v1676 = vunpack.c.l.b16 %v1669
      %v1677 = vunpack.c.l.b16 %v1670
      %v1678 = vpack.c.b16 %v1677, %v1676
      %1682 = vrot.lane.b32.xlu0 %v1671, 95
      %v1683 = vpop.permute.xlu0 %1682
      %1684 = vrot.lane.b32.xlu0 %v1672, 95
      %v1685 = vpop.permute.xlu0 %1684
      %1686 = vrot.lane.b32.xlu0 %v1673, 95
      %v1687 = vpop.permute.xlu0 %1686
      %v1688 = vsel %vm900, %v1683, %v1685
      %v1689 = vsel %vm900, %v1685, %v1687
      %v1691 = vsel %vm1112, %v1678, 0
      %v1694 = vsel %vm1116, %v1688, 0
      %v1697 = vsel %vm1116, %v1689, 0
      %1699 = vmatprep.subr.bf16.mxu0 0
      %1700 = vmatpush1.bf16.msra.mxu0 0
      %1701 = vmatprep.subr.bf16.mxu0 0
      %1702 = vmatpush1.bf16.msra.mxu0 0
      %1703 = vmatprep.subr.bf16.mxu0 0
      %1704 = vmatpush1.bf16.msra.mxu0 0
      %1705 = vmatprep.subr.bf16.mxu0 0
      %1706 = vmatpush1.bf16.msra.mxu0 0
      %1707 = vmatprep.subr.bf16.mxu0 0
      %1708 = vmatpush1.bf16.msra.mxu0 0
      %1709 = vmatprep.subr.bf16.mxu0 0
      %1710 = vmatpush1.bf16.msra.mxu0 0
      %1711 = vmatprep.subr.bf16.mxu0 0
      %1712 = vmatpush1.bf16.msra.mxu0 0
      %1713 = vmatprep.subr.bf16.mxu0 %v1697
      %1714 = vmatpush1.bf16.msra.mxu0 %v1694
      %1715 = vmatprep.subr.bf16.mxu0 0
      %1716 = vmatpush2.bf16.msra.mxu0 0
      %1717 = vmatprep.subr.bf16.mxu0 0
      %1718 = vmatpush2.bf16.msra.mxu0 0
      %1719 = vmatprep.subr.bf16.mxu0 0
      %1720 = vmatpush2.bf16.msra.mxu0 0
      %1721 = vmatprep.subr.bf16.mxu0 0
      %1722 = vmatpush2.bf16.msra.mxu0 0
      %1723 = vmatprep.subr.bf16.mxu0 0
      %1724 = vmatpush2.bf16.msra.mxu0 0
      %1725 = vmatprep.subr.bf16.mxu0 0
      %1726 = vmatpush2.bf16.msra.mxu0 0
      %1727 = vmatprep.subr.bf16.mxu0 0
      %1728 = vmatpush2.bf16.msra.mxu0 0
      %1729 = vmatprep.subr.bf16.mxu0 0
      %1730 = vmatpush2.bf16.msra.mxu0 0
      %1731 = vmatprep.mubr.bf16.mxu0 0
      %1732 = vmatmul.mubr.bf16.gmra.mxu0 %v1691
      %v1733 = vpop.f32.mrf.mxu0
      %v1734 = vadd.f32 0.0, %v1733
      %v1735 = vpop.f32.mrf.mxu0
      %v1736 = vadd.f32 0.0, %v1735
      %v1737 = vpop.f32.mrf.mxu0
      %v1738 = vadd.f32 0.0, %v1737
      %v1739 = vpop.f32.mrf.mxu0
      %v1740 = vadd.f32 0.0, %v1739
      %1741 = vdwg.mxu0
      %v1742 = vadd.f32 %v1653, %v1734
      %v1743 = vadd.f32 %v1654, %v1736
      %v1744 = vadd.f32 %v1655, %v1738
      %v1745 = vadd.f32 %v1656, %v1740
      %1746 = vrot.lane.b32.xlu0 %v961, 34
      %v1747 = vpop.permute.xlu0 %1746
      %1748 = vrot.lane.b32.xlu0 %v965, 34
      %v1749 = vpop.permute.xlu0 %1748
      %v1750 = vsel %vm970, %v1747, %v1749
      %v1754 = vmul.f32 %v1069, %v1747
      %v1755 = vmul.f32 %v1065, %v1750
      %v1756 = vmul.f32 %v1070, %v1749
      %s1757 = scalar_lea.vmem %s3, 64
      %v1758 = vld [vmem:[%s1757] sm:$0xf]
      %v1759 = vld [vmem:[%s1757 + $0x4] sm:$0xf]
      %v1760 = vpack.c.bf16 %v1754, %v1754
      %v1761 = vpack.c.bf16 %v1755, %v1755
      %v1762 = vpack.c.bf16 %v1756, %v1756
      %v1765 = vunpack.c.l.b16 %v1758
      %v1766 = vunpack.c.l.b16 %v1759
      %v1767 = vpack.c.b16 %v1766, %v1765
      %1771 = vrot.lane.b32.xlu0 %v1760, 94
      %v1772 = vpop.permute.xlu0 %1771
      %1773 = vrot.lane.b32.xlu0 %v1761, 94
      %v1774 = vpop.permute.xlu0 %1773
      %1775 = vrot.lane.b32.xlu0 %v1762, 94
      %v1776 = vpop.permute.xlu0 %1775
      %v1777 = vsel %vm993, %v1772, %v1774
      %v1778 = vsel %vm993, %v1774, %v1776
      %v1780 = vsel %vm1112, %v1767, 0
      %v1783 = vsel %vm1116, %v1777, 0
      %v1786 = vsel %vm1116, %v1778, 0
      %1788 = vmatprep.subr.bf16.mxu0 0
      %1789 = vmatpush1.bf16.msra.mxu0 0
      %1790 = vmatprep.subr.bf16.mxu0 0
      %1791 = vmatpush1.bf16.msra.mxu0 0
      %1792 = vmatprep.subr.bf16.mxu0 0
      %1793 = vmatpush1.bf16.msra.mxu0 0
      %1794 = vmatprep.subr.bf16.mxu0 0
      %1795 = vmatpush1.bf16.msra.mxu0 0
      %1796 = vmatprep.subr.bf16.mxu0 0
      %1797 = vmatpush1.bf16.msra.mxu0 0
      %1798 = vmatprep.subr.bf16.mxu0 0
      %1799 = vmatpush1.bf16.msra.mxu0 0
      %1800 = vmatprep.subr.bf16.mxu0 0
      %1801 = vmatpush1.bf16.msra.mxu0 0
      %1802 = vmatprep.subr.bf16.mxu0 %v1786
      %1803 = vmatpush1.bf16.msra.mxu0 %v1783
      %1804 = vmatprep.subr.bf16.mxu0 0
      %1805 = vmatpush2.bf16.msra.mxu0 0
      %1806 = vmatprep.subr.bf16.mxu0 0
      %1807 = vmatpush2.bf16.msra.mxu0 0
      %1808 = vmatprep.subr.bf16.mxu0 0
      %1809 = vmatpush2.bf16.msra.mxu0 0
      %1810 = vmatprep.subr.bf16.mxu0 0
      %1811 = vmatpush2.bf16.msra.mxu0 0
      %1812 = vmatprep.subr.bf16.mxu0 0
      %1813 = vmatpush2.bf16.msra.mxu0 0
      %1814 = vmatprep.subr.bf16.mxu0 0
      %1815 = vmatpush2.bf16.msra.mxu0 0
      %1816 = vmatprep.subr.bf16.mxu0 0
      %1817 = vmatpush2.bf16.msra.mxu0 0
      %1818 = vmatprep.subr.bf16.mxu0 0
      %1819 = vmatpush2.bf16.msra.mxu0 0
      %1820 = vmatprep.mubr.bf16.mxu0 0
      %1821 = vmatmul.mubr.bf16.gmra.mxu0 %v1780
      %v1822 = vpop.f32.mrf.mxu0
      %v1823 = vadd.f32 0.0, %v1822
      %v1824 = vpop.f32.mrf.mxu0
      %v1825 = vadd.f32 0.0, %v1824
      %v1826 = vpop.f32.mrf.mxu0
      %v1827 = vadd.f32 0.0, %v1826
      %v1828 = vpop.f32.mrf.mxu0
      %v1829 = vadd.f32 0.0, %v1828
      %1830 = vdwg.mxu0
      %v1831 = vadd.f32 %v1742, %v1823
      %v1832 = vadd.f32 %v1743, %v1825
      %v1833 = vadd.f32 %v1744, %v1827
      %v1834 = vadd.f32 %v1745, %v1829
      %v1835 = vld [vmem:[%s4] sm:$0xff]
      %v1836 = vld [vmem:[%s4 + $0x8] sm:$0xff]
      %1838 = vset.pattern.permute.xlu0 0
      %1839 = vperm.xlu0 %1838, %v1835
      %v1840 = vpop.permute.xlu0 %1839
      %1843 = vset.pattern.permute.xlu0 0
      %1844 = vperm.xlu0 %1843, %v1836
      %v1845 = vpop.permute.xlu0 %1844
      %v1847 = vadd.f32 %v1831, %v1840
      %v1848 = vadd.f32 %v1832, %v1840
      %v1849 = vadd.f32 %v1833, %v1845
      %v1850 = vadd.f32 %v1834, %v1845
      %v1851 = vmax.f32 %v1847, 0.0
      %v1852 = vmax.f32 %v1848, 0.0
      %v1853 = vmax.f32 %v1849, 0.0
      %v1854 = vmax.f32 %v1850, 0.0
      %v1855 = vadd.f32 %v1851, %v1852
      %1856 = vadd.xlane.f32.xlu0 %v1855
      %v1857 = vpop.xlane.xlu0 %1856
      %v1858 = vadd.f32 %v1853, %v1854
      %1859 = vadd.xlane.f32.xlu0 %v1858
      %v1860 = vpop.xlane.xlu0 %1859
      %v1861 = vrcp.pop 256.0
      %v1862 = vmul.f32 %v1857, %v1861
      %v1863 = vmul.f32 %v1860, %v1861
      %1864 = vst.msk [vmem:[%s251] sm:$0xff] %vm290, %v1862
      %1865 = vst.msk [vmem:[%s251 + $0x8] sm:$0xff] %vm290, %v1863
      %p1866 = scmp.lt.s32.totalorder %s17, 1
      %s1867 = scalar_select %p1866, %s17, 1
      %s1868 = smul.addr %s1867, 2
      %s1869 = smul.addr %s1868, 8
      %s1870 = scalar_lea.vmem %s6, %s1869
      // Predicated region
      $region45: #{tpu_custom_call.1} parent=43 // pred_check
        %p1871 = pneg %p166
      $region46: #{tpu_custom_call.1} parent=43 // pred_check_branch
        %1873 = sbr.rel (%p1871) target = $region48
      $region47: #{tpu_custom_call.1} parent=43 // pred_region
        _
      $region48: #{tpu_custom_call.1} parent=43 // pred_fallthru
        _
    $region44: #{tpu_custom_call.1} parent=5 // pred_fallthru
      _
    %p1874 = scmp.le.s32.totalorder 2, %s12
    // Predicated region
    $region49: #{tpu_custom_call.1} parent=5 // pred_check
      %p1875 = pneg %p1874
    $region50: #{tpu_custom_call.1} parent=5 // pred_check_branch
      %1877 = sbr.rel (%p1875) target = $region52
    $region51: #{tpu_custom_call.1} parent=5 // pred_region
      %s1878 = ssub.s32 %s12, 2
      // Predicated region
      $region53: #{tpu_custom_call.1} parent=51 // pred_check
        %p1879 = pneg %p172
      $region54: #{tpu_custom_call.1} parent=51 // pred_check_branch
        %1881 = sbr.rel (%p1879) target = $region56
      $region55: #{tpu_custom_call.1} parent=51 // pred_region
        %p1882 = scmp.lt.s32.totalorder %s18, 1
        %s1883 = scalar_select %p1882, %s18, 1
        %s1884 = smul.addr %s1883, 2
        %s1885 = smul.addr %s1884, 8
        %s1886 = scalar_lea.vmem %s6, %s1885
      $region56: #{tpu_custom_call.1} parent=51 // pred_fallthru
        _
    $region52: #{tpu_custom_call.1} parent=5 // pred_fallthru
      _
  $region6: #{tpu_custom_call.1} parent=0 // loop_footer
    %s16 = sadd.s32 1, %s12
  $region7: #{tpu_custom_call.1} parent=0 // loop_footer_branch
    %11 = sbr.rel target = $region3
  $region8: #{tpu_custom_call.1} parent=0 // loop_exit
    _

</llo_original>
